<compile_context>
chip_gen: v6e
topology: v6e:2x2x1
jax: 0.10.0
libtpu: 0.0.40
codegen_flags: <defaults>
</compile_context>

<pallas_src>
import math

import jax
import jax.numpy as jnp
from jax.experimental import pallas as pl
from jax.experimental.pallas import tpu as pltpu

DIM = 32          # model feature dim
FF_DIM = 2048     # hidden dim of the feed-forward block (module default)


def ffn_kernel(x_ref, w1_ref, b1_ref, w2_ref, b2_ref, o_ref):
    # x_ref: (block_m, dim) rows of the flattened (B*T, dim) input.
    x = x_ref[...]

    # linear1 + ReLU  (bias broadcasts over rows)
    h = jnp.dot(x, w1_ref[...], preferred_element_type=jnp.float32) + b1_ref[...]
    h = jnp.maximum(h, 0.0)

    # TODO(synk): train-mode dropout not implemented (eval / inference semantics,
    #             dropout acts as identity).

    # linear2
    out = jnp.dot(h.astype(w2_ref.dtype), w2_ref[...],
                  preferred_element_type=jnp.float32) + b2_ref[...]
    o_ref[...] = out.astype(o_ref.dtype)


def feed_forward(x, params):
    """x: (B, T, dim) -> (B, T, dim). params = (w1, b1, w2, b2)."""
    B, T, dim = x.shape
    w1, b1, w2, b2 = params
    ff_dim = w1.shape[1]

    M = B * T
    x2 = x.reshape(M, dim)              # fold batch+seq into the matmul M axis

    # Two row-blocks when possible so both v7x TensorCores get work
    # (rows-per-block must stay a multiple of 8 sublanes, or equal M).
    if M % 16 == 0:
        block_m = M // 2
    else:
        block_m = M
    grid = (M // block_m,)

    x_spec = pl.BlockSpec((block_m, dim), lambda i: (i, 0))
    w1_spec = pl.BlockSpec((dim, ff_dim), lambda i: (0, 0))
    b1_spec = pl.BlockSpec((1, ff_dim), lambda i: (0, 0))
    w2_spec = pl.BlockSpec((ff_dim, dim), lambda i: (0, 0))
    b2_spec = pl.BlockSpec((1, dim), lambda i: (0, 0))
    o_spec = pl.BlockSpec((block_m, dim), lambda i: (i, 0))

    out2 = pl.pallas_call(
        ffn_kernel,
        out_shape=jax.ShapeDtypeStruct((M, dim), x.dtype),
        grid_spec=pltpu.PrefetchScalarGridSpec(
            num_scalar_prefetch=0,
            grid=grid,
            in_specs=[x_spec, w1_spec, b1_spec, w2_spec, b2_spec],
            out_specs=o_spec),
        compiler_params=pltpu.CompilerParams(
            dimension_semantics=("parallel",)),
    )(x2, w1, b1, w2, b2)

    return out2.reshape(B, T, dim)


def reference_ffn(x, params):
    # Pure-JAX reference mirroring the PyTorch forward (eval mode, no dropout).
    w1, b1, w2, b2 = params
    h = jnp.maximum(x @ w1 + b1, 0.0)
    return h @ w2 + b2


def init_params(key, dim, ff_dim):
    k1, k2, k3, k4 = jax.random.split(key, 4)
    s1 = 1.0 / math.sqrt(dim)
    s2 = 1.0 / math.sqrt(ff_dim)
    w1 = jax.random.normal(k1, (dim, ff_dim), jnp.float32) * s1
    b1 = jax.random.normal(k2, (1, ff_dim), jnp.float32) * 0.01
    w2 = jax.random.normal(k3, (ff_dim, dim), jnp.float32) * s2
    b2 = jax.random.normal(k4, (1, dim), jnp.float32) * 0.01
    return (w1, b1, w2, b2)


if __name__ == "__main__":
    B, T = 2, 8
    root = jax.random.PRNGKey(0)
    kx, kp = jax.random.split(root, 2)
    x = jax.random.normal(kx, (B, T, DIM), jnp.float32)
    params = init_params(kp, DIM, FF_DIM)

    out = feed_forward(x, params)
    out = jax.block_until_ready(out)

    ref = reference_ffn(x, params)
    assert out.shape == (B, T, DIM)
    assert jnp.allclose(out, ref, rtol=1e-4, atol=1e-4), "mismatch vs reference"
    print("KERNEL_OK")
</pallas_src>

<mosaic_0001>
module attributes {stable_mosaic.version = 11 : i64} {
  func.func @ffn_kernel(%arg0: i32, %arg1: memref<8x32xf32, #tpu.memory_space<vmem>>, %arg2: memref<32x2048xf32, #tpu.memory_space<vmem>>, %arg3: memref<1x2048xf32, #tpu.memory_space<vmem>>, %arg4: memref<2048x32xf32, #tpu.memory_space<vmem>>, %arg5: memref<1x32xf32, #tpu.memory_space<vmem>>, %arg6: memref<8x32xf32, #tpu.memory_space<vmem>>) attributes {dimension_semantics = [#tpu.dimension_semantics<parallel>], iteration_bounds = array<i64: 2>, scalar_prefetch = 0 : i64, scratch_operands = 0 : i64, tpu.core_type = #tpu.core_type<tc>, window_params = [{transform_indices = @transform_0, window_bounds = array<i64: 8, 32>}, {pipeline_mode = #tpu.pipeline_mode<synchronous>, transform_indices = @transform_1, window_bounds = array<i64: 32, 2048>}, {pipeline_mode = #tpu.pipeline_mode<synchronous>, transform_indices = @transform_2, window_bounds = array<i64: 1, 2048>}, {pipeline_mode = #tpu.pipeline_mode<synchronous>, transform_indices = @transform_3, window_bounds = array<i64: 2048, 32>}, {pipeline_mode = #tpu.pipeline_mode<synchronous>, transform_indices = @transform_4, window_bounds = array<i64: 1, 32>}, {transform_indices = @transform_5, window_bounds = array<i64: 8, 32>}]} {
    %c0 = arith.constant 0 : index
    %c0_0 = arith.constant 0 : index
    %0 = vector.load %arg1[%c0, %c0_0] : memref<8x32xf32, #tpu.memory_space<vmem>>, vector<8x32xf32>
    %c0_1 = arith.constant 0 : index
    %c0_2 = arith.constant 0 : index
    %1 = vector.load %arg2[%c0_1, %c0_2] : memref<32x2048xf32, #tpu.memory_space<vmem>>, vector<32x2048xf32>
    %cst = arith.constant dense<0.000000e+00> : vector<8x2048xf32>
    %2 = tpu.matmul %0, %1, %cst {dimension_numbers = #tpu.dot_dimension_numbers<[1], [0], [0], [1], [0, 0, 1, 1], [], []>} : vector<8x32xf32>, vector<32x2048xf32>, vector<8x2048xf32> -> vector<8x2048xf32>
    %c0_3 = arith.constant 0 : index
    %c0_4 = arith.constant 0 : index
    %3 = vector.load %arg3[%c0_3, %c0_4] : memref<1x2048xf32, #tpu.memory_space<vmem>>, vector<1x2048xf32>
    %4 = vector.broadcast %3 : vector<1x2048xf32> to vector<8x2048xf32>
    %5 = arith.addf %2, %4 : vector<8x2048xf32>
    %cst_5 = arith.constant 0.000000e+00 : f32
    %6 = vector.broadcast %cst_5 : f32 to vector<8x2048xf32>
    %7 = arith.maximumf %5, %6 : vector<8x2048xf32>
    %c0_6 = arith.constant 0 : index
    %c0_7 = arith.constant 0 : index
    %8 = vector.load %arg4[%c0_6, %c0_7] : memref<2048x32xf32, #tpu.memory_space<vmem>>, vector<2048x32xf32>
    %cst_8 = arith.constant dense<0.000000e+00> : vector<8x32xf32>
    %9 = tpu.matmul %7, %8, %cst_8 {dimension_numbers = #tpu.dot_dimension_numbers<[1], [0], [0], [1], [0, 0, 1, 1], [], []>} : vector<8x2048xf32>, vector<2048x32xf32>, vector<8x32xf32> -> vector<8x32xf32>
    %c0_9 = arith.constant 0 : index
    %c0_10 = arith.constant 0 : index
    %10 = vector.load %arg5[%c0_9, %c0_10] : memref<1x32xf32, #tpu.memory_space<vmem>>, vector<1x32xf32>
    %11 = vector.broadcast %10 : vector<1x32xf32> to vector<8x32xf32>
    %12 = arith.addf %9, %11 : vector<8x32xf32>
    %c0_11 = arith.constant 0 : index
    %c0_12 = arith.constant 0 : index
    %13 = vector.load %arg6[%c0_11, %c0_12] : memref<8x32xf32, #tpu.memory_space<vmem>>, vector<8x32xf32>
    tpu.vector_store %arg6[%c0_11, %c0_12], %12 {strides = array<i32>} : memref<8x32xf32, #tpu.memory_space<vmem>>, vector<8x32xf32>,
    return
  }
  func.func @transform_0(%arg0: i32) -> (i32, i32) {
    %c0_i32 = arith.constant 0 : i32
    %c0_i32_0 = arith.constant 0 : i32
    return %arg0, %c0_i32 : i32, i32
  }
  func.func @transform_1(%arg0: i32) -> (i32, i32) {
    %c0_i32 = arith.constant 0 : i32
    %c0_i32_0 = arith.constant 0 : i32
    %c0_i32_1 = arith.constant 0 : i32
    return %c0_i32, %c0_i32_0 : i32, i32
  }
  func.func @transform_2(%arg0: i32) -> (i32, i32) {
    %c0_i32 = arith.constant 0 : i32
    %c0_i32_0 = arith.constant 0 : i32
    %c0_i32_1 = arith.constant 0 : i32
    return %c0_i32, %c0_i32_0 : i32, i32
  }
  func.func @transform_3(%arg0: i32) -> (i32, i32) {
    %c0_i32 = arith.constant 0 : i32
    %c0_i32_0 = arith.constant 0 : i32
    %c0_i32_1 = arith.constant 0 : i32
    return %c0_i32, %c0_i32_0 : i32, i32
  }
  func.func @transform_4(%arg0: i32) -> (i32, i32) {
    %c0_i32 = arith.constant 0 : i32
    %c0_i32_0 = arith.constant 0 : i32
    %c0_i32_1 = arith.constant 0 : i32
    return %c0_i32, %c0_i32_0 : i32, i32
  }
  func.func @transform_5(%arg0: i32) -> (i32, i32) {
    %c0_i32 = arith.constant 0 : i32
    %c0_i32_0 = arith.constant 0 : i32
    return %arg0, %c0_i32 : i32, i32
  }
}

</mosaic_0001>

<llo_original>
// kernel: tpu_custom_call.1
$region0: #{tpu_custom_call.1}
  #allocation0 [shape = 'u32[]', space=smem, size = 0x4, offset = 0x4, fixed_abs, tag = 'smem constant byte address 0x4 - core index']
  #allocation1 [shape = 'u32[144,128]{1,0:T(1,128)}', space=vmem, size = 0x12000, scoped, tag = 'internal scratch']
  %s0 = inlined_call_operand.vmem [shape: f32[16,32], index: 0, kind: input, shape index: {}]
  %s1 = inlined_call_operand.vmem [shape: f32[32,2048], index: 1, kind: input, shape index: {}]
  %s2 = inlined_call_operand.vmem [shape: f32[1,2048], index: 2, kind: input, shape index: {}]
  %s3 = inlined_call_operand.vmem [shape: f32[2048,32], index: 3, kind: input, shape index: {}]
  %s4 = inlined_call_operand.vmem [shape: f32[1,32], index: 4, kind: input, shape index: {}]
  %s5 = inlined_call_operand.hbm [shape: f32[16,32], index: 5, kind: output, shape index: {}]
  %s6 = sld [smem:[#allocation0]]
  $region53: #{tpu_custom_call.1} parent=0
    _
  %s8 = ssub.s32 1, %s6
  %s9 = scalar_select 0, %s8, %s6
  $region1: #{tpu_custom_call.1} parent=0
    #allocation2 [shape = 'u8[8192]{0}', space=vmem, size = 0x2000, scoped, tag = 'output window, operand 0']
    #allocation3 [shape = 's32[2]{0}', space=sflag, size = 0x8, scoped, tag = 'scoped memory for tpu_custom_call.1']
    %10 = vsyncpa [#allocation3], 0
    %s11 = scalar_lea.sflag [#allocation3], 1
    %12 = vsyncpa %s11, 0
    loop: start=0, step=1, limit=4
    $region2: #{tpu_custom_call.1} parent=1 // loop_pre_header
      _
    $region3: #{tpu_custom_call.1} parent=1 // loop_header
      %s14 = sphi 0, %s18
      %p15 = scmp.ge.s32.totalorder %s14, 4
      %s24 = sphi 0, %s26
      %s27 = sphi 0, %s24
      %s28 = sphi 0, %s27
      %s44 = sphi 0, %s28
      %s48 = sphi 0, %s48
      %s50 = sphi 0, %s48
      %s51 = sphi 0, %s50
      %s65 = sphi 0, %s51
      %s69 = sphi 0, %s69
      %s71 = sphi 0, %s69
      %s72 = sphi 0, %s71
      %s86 = sphi 0, %s72
      %s90 = sphi 0, %s90
      %s92 = sphi 0, %s90
      %s93 = sphi 0, %s92
      %s107 = sphi 0, %s93
      %s111 = sphi 0, %s111
      %s113 = sphi 0, %s111
      %s114 = sphi 0, %s113
      %s128 = sphi 0, %s114
      %s134 = sphi 0, %s136
      %s137 = sphi 0, %s134
      %s138 = sphi 0, %s137
      %s154 = sphi 0, %s138
    $region4: #{tpu_custom_call.1} parent=1 // loop_header_branch
      %17 = sbr.rel (%p15) target = $region8
    $region5: #{tpu_custom_call.1} parent=1 // loop_body
      %s19 = ssub.s32 %s14, 1
      %s20 = ssub.s32 %s14, 2
      %s21 = sadd.s32 %s14, 1
      %s22 = ssub.s32 %s14, %s21
      %p23 = scmp.eq.s32.totalorder %s22, 0
      %s25 = sadd.s32 %s24, 1
      %s26 = scalar_select %p23, %s24, %s25
      %p29 = pneg %p23
      %p30 = scmp.eq.s32.totalorder %s14, 1
      %p31 = por %p29, %p30
      %p32 = scmp.ne.s32.totalorder %s24, %s27
      %p33 = scmp.eq.s32.totalorder %s14, 0
      %p34 = por %p32, %p33
      %p35 = scmp.ne.s32.totalorder %s24, %s27
      %p36 = scmp.eq.s32.totalorder %s19, 1
      %p37 = por %p35, %p36
      %p38 = scmp.ne.s32.totalorder %s27, %s28
      %p39 = scmp.eq.s32.totalorder %s19, 0
      %p40 = por %p38, %p39
      %p41 = scmp.ne.s32.totalorder %s27, %s28
      %p42 = scmp.eq.s32.totalorder %s20, 1
      %p43 = por %p41, %p42
      %p45 = scmp.ne.s32.totalorder %s28, %s44
      %p46 = scmp.eq.s32.totalorder %s20, 0
      %p47 = por %p45, %p46
      %s49 = sadd.s32 %s48, 1
      %p52 = scmp.eq.s32.totalorder %s14, 1
      %p53 = scmp.ne.s32.totalorder %s48, %s50
      %p54 = scmp.eq.s32.totalorder %s14, 0
      %p55 = por %p53, %p54
      %p56 = scmp.ne.s32.totalorder %s48, %s50
      %p57 = scmp.eq.s32.totalorder %s19, 1
      %p58 = por %p56, %p57
      %p59 = scmp.ne.s32.totalorder %s50, %s51
      %p60 = scmp.eq.s32.totalorder %s19, 0
      %p61 = por %p59, %p60
      %p62 = scmp.ne.s32.totalorder %s50, %s51
      %p63 = scmp.eq.s32.totalorder %s20, 1
      %p64 = por %p62, %p63
      %p66 = scmp.ne.s32.totalorder %s51, %s65
      %p67 = scmp.eq.s32.totalorder %s20, 0
      %p68 = por %p66, %p67
      %s70 = sadd.s32 %s69, 1
      %p73 = scmp.eq.s32.totalorder %s14, 1
      %p74 = scmp.ne.s32.totalorder %s69, %s71
      %p75 = scmp.eq.s32.totalorder %s14, 0
      %p76 = por %p74, %p75
      %p77 = scmp.ne.s32.totalorder %s69, %s71
      %p78 = scmp.eq.s32.totalorder %s19, 1
      %p79 = por %p77, %p78
      %p80 = scmp.ne.s32.totalorder %s71, %s72
      %p81 = scmp.eq.s32.totalorder %s19, 0
      %p82 = por %p80, %p81
      %p83 = scmp.ne.s32.totalorder %s71, %s72
      %p84 = scmp.eq.s32.totalorder %s20, 1
      %p85 = por %p83, %p84
      %p87 = scmp.ne.s32.totalorder %s72, %s86
      %p88 = scmp.eq.s32.totalorder %s20, 0
      %p89 = por %p87, %p88
      %s91 = sadd.s32 %s90, 1
      %p94 = scmp.eq.s32.totalorder %s14, 1
      %p95 = scmp.ne.s32.totalorder %s90, %s92
      %p96 = scmp.eq.s32.totalorder %s14, 0
      %p97 = por %p95, %p96
      %p98 = scmp.ne.s32.totalorder %s90, %s92
      %p99 = scmp.eq.s32.totalorder %s19, 1
      %p100 = por %p98, %p99
      %p101 = scmp.ne.s32.totalorder %s92, %s93
      %p102 = scmp.eq.s32.totalorder %s19, 0
      %p103 = por %p101, %p102
      %p104 = scmp.ne.s32.totalorder %s92, %s93
      %p105 = scmp.eq.s32.totalorder %s20, 1
      %p106 = por %p104, %p105
      %p108 = scmp.ne.s32.totalorder %s93, %s107
      %p109 = scmp.eq.s32.totalorder %s20, 0
      %p110 = por %p108, %p109
      %s112 = sadd.s32 %s111, 1
      %p115 = scmp.eq.s32.totalorder %s14, 1
      %p116 = scmp.ne.s32.totalorder %s111, %s113
      %p117 = scmp.eq.s32.totalorder %s14, 0
      %p118 = por %p116, %p117
      %p119 = scmp.ne.s32.totalorder %s111, %s113
      %p120 = scmp.eq.s32.totalorder %s19, 1
      %p121 = por %p119, %p120
      %p122 = scmp.ne.s32.totalorder %s113, %s114
      %p123 = scmp.eq.s32.totalorder %s19, 0
      %p124 = por %p122, %p123
      %p125 = scmp.ne.s32.totalorder %s113, %s114
      %p126 = scmp.eq.s32.totalorder %s20, 1
      %p127 = por %p125, %p126
      %p129 = scmp.ne.s32.totalorder %s114, %s128
      %p130 = scmp.eq.s32.totalorder %s20, 0
      %p131 = por %p129, %p130
      %s132 = ssub.s32 %s14, %s21
      %p133 = scmp.eq.s32.totalorder %s132, 0
      %s135 = sadd.s32 %s134, 1
      %s136 = scalar_select %p133, %s134, %s135
      %p139 = pneg %p133
      %p140 = scmp.eq.s32.totalorder %s14, 1
      %p141 = por %p139, %p140
      %p142 = scmp.ne.s32.totalorder %s134, %s137
      %p143 = scmp.eq.s32.totalorder %s14, 0
      %p144 = por %p142, %p143
      %p145 = scmp.ne.s32.totalorder %s134, %s137
      %p146 = scmp.eq.s32.totalorder %s19, 1
      %p147 = por %p145, %p146
      %p148 = scmp.ne.s32.totalorder %s137, %s138
      %p149 = scmp.eq.s32.totalorder %s19, 0
      %p150 = por %p148, %p149
      %p151 = scmp.ne.s32.totalorder %s137, %s138
      %p152 = scmp.eq.s32.totalorder %s20, 1
      %p153 = por %p151, %p152
      %p155 = scmp.ne.s32.totalorder %s138, %s154
      %p156 = scmp.eq.s32.totalorder %s20, 0
      %p157 = por %p155, %p156
      %p158 = scmp.le.s32.totalorder 1, %s14
      %p159 = scmp.lt.s32.totalorder %s14, 3
      %p160 = pnand %p158, %p159
      %p161 = pneg %p160
      // Predicated region
      $region9: #{tpu_custom_call.1} parent=5 // pred_check
        _
      $region10: #{tpu_custom_call.1} parent=5 // pred_check_branch
        %163 = sbr.rel (%p160) target = $region12
      $region11: #{tpu_custom_call.1} parent=5 // pred_region
        %s164 = ssub.s32 %s14, 1
        // Predicated region
        $region13: #{tpu_custom_call.1} parent=11 // pred_check
          %p165 = pneg %p61
        $region14: #{tpu_custom_call.1} parent=11 // pred_check_branch
          %167 = sbr.rel (%p165) target = $region16
        $region15: #{tpu_custom_call.1} parent=11 // pred_region
          _
        $region16: #{tpu_custom_call.1} parent=11 // pred_fallthru
          _
        // Predicated region
        $region17: #{tpu_custom_call.1} parent=11 // pred_check
          %p168 = pneg %p82
        $region18: #{tpu_custom_call.1} parent=11 // pred_check_branch
          %170 = sbr.rel (%p168) target = $region20
        $region19: #{tpu_custom_call.1} parent=11 // pred_region
          _
        $region20: #{tpu_custom_call.1} parent=11 // pred_fallthru
          _
        // Predicated region
        $region21: #{tpu_custom_call.1} parent=11 // pred_check
          %p171 = pneg %p103
        $region22: #{tpu_custom_call.1} parent=11 // pred_check_branch
          %173 = sbr.rel (%p171) target = $region24
        $region23: #{tpu_custom_call.1} parent=11 // pred_region
          _
        $region24: #{tpu_custom_call.1} parent=11 // pred_fallthru
          _
        // Predicated region
        $region25: #{tpu_custom_call.1} parent=11 // pred_check
          %p174 = pneg %p124
        $region26: #{tpu_custom_call.1} parent=11 // pred_check_branch
          %176 = sbr.rel (%p174) target = $region28
        $region27: #{tpu_custom_call.1} parent=11 // pred_region
          _
        $region28: #{tpu_custom_call.1} parent=11 // pred_fallthru
          _
      $region12: #{tpu_custom_call.1} parent=5 // pred_fallthru
        _
      %p177 = scmp.lt.s32.totalorder %s14, 2
      // Predicated region
      $region29: #{tpu_custom_call.1} parent=5 // pred_check
        %p178 = pneg %p177
      $region30: #{tpu_custom_call.1} parent=5 // pred_check_branch
        %180 = sbr.rel (%p178) target = $region32
      $region31: #{tpu_custom_call.1} parent=5 // pred_region
        // Predicated region
        $region33: #{tpu_custom_call.1} parent=31 // pred_check
          %p181 = pneg %p34
        $region34: #{tpu_custom_call.1} parent=31 // pred_check_branch
          %183 = sbr.rel (%p181) target = $region36
        $region35: #{tpu_custom_call.1} parent=31 // pred_region
          %p184 = scmp.lt.s32.totalorder %s14, 1
          %s185 = scalar_select %p184, %s14, 1
          %s186 = smul.addr %s185, 8
          %s187 = scalar_lea.vmem %s0, %s186
        $region36: #{tpu_custom_call.1} parent=31 // pred_fallthru
          _
      $region32: #{tpu_custom_call.1} parent=5 // pred_fallthru
        _
      %p188 = scmp.le.s32.totalorder 1, %s14
      %p189 = scmp.lt.s32.totalorder %s14, 3
      %p190 = pnand %p188, %p189
      %p191 = pneg %p190
      // Predicated region
      $region37: #{tpu_custom_call.1} parent=5 // pred_check
        _
      $region38: #{tpu_custom_call.1} parent=5 // pred_check_branch
        %193 = sbr.rel (%p190) target = $region40
      $region39: #{tpu_custom_call.1} parent=5 // pred_region
        %s194 = ssub.s32 %s14, 1
        %p195 = scmp.lt.s32.totalorder %s19, 1
        %s196 = scalar_select %p195, %s19, 1
        %s197 = smul.addr %s196, 8
        %s198 = scalar_lea.vmem %s0, %s197
        %p199 = pneg %p40
        %p200 = pneg %p37
        %p201 = pneg %p61
        %p202 = pneg %p58
        %p203 = pneg %p82
        %p204 = pneg %p79
        %p205 = pneg %p103
        %p206 = pneg %p100
        %p207 = pneg %p124
        %p208 = pneg %p121
        %p209 = pneg %p150
        %p210 = pneg %p147
        %s211 = sand.u32 %s137, 1
        %s212 = scalar_lea.sflag [#allocation3], %s211
        %s213 = sand.u32 %s137, 1
        %s214 = smul.addr %s213, 8
        %s215 = scalar_lea.vmem [#allocation2], %s214
        %p216 = scmp.lt.s32.totalorder %s19, 1
        %s217 = scalar_select %p216, %s19, 1
        %s218 = smul.addr %s217, 8
        %s219 = scalar_lea.vmem %s0, %s218
        %v220 = vld [vmem:[%s219] sm:$0xff]
        %v221 = vld [vmem:[%s1] sm:$0xff]
        %v222 = vld [vmem:[%s1 + $0x8] sm:$0xff]
        %v223 = vld [vmem:[%s1 + $0x10] sm:$0xff]
        %v224 = vld [vmem:[%s1 + $0x18] sm:$0xff]
        %v225 = vld [vmem:[%s1 + $0x20] sm:$0xff]
        %v226 = vld [vmem:[%s1 + $0x28] sm:$0xff]
        %v227 = vld [vmem:[%s1 + $0x30] sm:$0xff]
        %v228 = vld [vmem:[%s1 + $0x38] sm:$0xff]
        %v229 = vld [vmem:[%s1 + $0x40] sm:$0xff]
        %v230 = vld [vmem:[%s1 + $0x48] sm:$0xff]
        %v231 = vld [vmem:[%s1 + $0x50] sm:$0xff]
        %v232 = vld [vmem:[%s1 + $0x58] sm:$0xff]
        %v233 = vld [vmem:[%s1 + $0x60] sm:$0xff]
        %v234 = vld [vmem:[%s1 + $0x68] sm:$0xff]
        %v235 = vld [vmem:[%s1 + $0x70] sm:$0xff]
        %v236 = vld [vmem:[%s1 + $0x78] sm:$0xff]
        %v237 = vld [vmem:[%s1 + $0x80] sm:$0xff]
        %v238 = vld [vmem:[%s1 + $0x88] sm:$0xff]
        %v239 = vld [vmem:[%s1 + $0x90] sm:$0xff]
        %v240 = vld [vmem:[%s1 + $0x98] sm:$0xff]
        %v241 = vld [vmem:[%s1 + $0xa0] sm:$0xff]
        %v242 = vld [vmem:[%s1 + $0xa8] sm:$0xff]
        %v243 = vld [vmem:[%s1 + $0xb0] sm:$0xff]
        %v244 = vld [vmem:[%s1 + $0xb8] sm:$0xff]
        %v245 = vld [vmem:[%s1 + $0xc0] sm:$0xff]
        %v246 = vld [vmem:[%s1 + $0xc8] sm:$0xff]
        %v247 = vld [vmem:[%s1 + $0xd0] sm:$0xff]
        %v248 = vld [vmem:[%s1 + $0xd8] sm:$0xff]
        %v249 = vld [vmem:[%s1 + $0xe0] sm:$0xff]
        %v250 = vld [vmem:[%s1 + $0xe8] sm:$0xff]
        %v251 = vld [vmem:[%s1 + $0xf0] sm:$0xff]
        %v252 = vld [vmem:[%s1 + $0xf8] sm:$0xff]
        %v253 = vld [vmem:[%s1 + $0x100] sm:$0xff]
        %v254 = vld [vmem:[%s1 + $0x108] sm:$0xff]
        %v255 = vld [vmem:[%s1 + $0x110] sm:$0xff]
        %v256 = vld [vmem:[%s1 + $0x118] sm:$0xff]
        %v257 = vld [vmem:[%s1 + $0x120] sm:$0xff]
        %v258 = vld [vmem:[%s1 + $0x128] sm:$0xff]
        %v259 = vld [vmem:[%s1 + $0x130] sm:$0xff]
        %v260 = vld [vmem:[%s1 + $0x138] sm:$0xff]
        %v261 = vld [vmem:[%s1 + $0x140] sm:$0xff]
        %v262 = vld [vmem:[%s1 + $0x148] sm:$0xff]
        %v263 = vld [vmem:[%s1 + $0x150] sm:$0xff]
        %v264 = vld [vmem:[%s1 + $0x158] sm:$0xff]
        %v265 = vld [vmem:[%s1 + $0x160] sm:$0xff]
        %v266 = vld [vmem:[%s1 + $0x168] sm:$0xff]
        %v267 = vld [vmem:[%s1 + $0x170] sm:$0xff]
        %v268 = vld [vmem:[%s1 + $0x178] sm:$0xff]
        %v269 = vld [vmem:[%s1 + $0x180] sm:$0xff]
        %v270 = vld [vmem:[%s1 + $0x188] sm:$0xff]
        %v271 = vld [vmem:[%s1 + $0x190] sm:$0xff]
        %v272 = vld [vmem:[%s1 + $0x198] sm:$0xff]
        %v273 = vld [vmem:[%s1 + $0x1a0] sm:$0xff]
        %v274 = vld [vmem:[%s1 + $0x1a8] sm:$0xff]
        %v275 = vld [vmem:[%s1 + $0x1b0] sm:$0xff]
        %v276 = vld [vmem:[%s1 + $0x1b8] sm:$0xff]
        %v277 = vld [vmem:[%s1 + $0x1c0] sm:$0xff]
        %v278 = vld [vmem:[%s1 + $0x1c8] sm:$0xff]
        %v279 = vld [vmem:[%s1 + $0x1d0] sm:$0xff]
        %v280 = vld [vmem:[%s1 + $0x1d8] sm:$0xff]
        %v281 = vld [vmem:[%s1 + $0x1e0] sm:$0xff]
        %v282 = vld [vmem:[%s1 + $0x1e8] sm:$0xff]
        %v283 = vld [vmem:[%s1 + $0x1f0] sm:$0xff]
        %v284 = vld [vmem:[%s1 + $0x1f8] sm:$0xff]
        %v285 = vld [vmem:[%s2] sm:$0xff]
        %v286 = vld [vmem:[%s2 + $0x8] sm:$0xff]
        %v289 = vlaneseq
        %v290 = vshrl.u32 %v289, 7
        %v291 = vsub.s32 0, %v290
        %v292 = vrot.slane %v285, %v291
        %v293 = vlaneseq
        %v294 = vshrl.u32 %v293, 7
        %v295 = vsub.s32 1, %v294
        %v296 = vrot.slane %v285, %v295
        %v297 = vlaneseq
        %v298 = vshrl.u32 %v297, 7
        %v299 = vsub.s32 2, %v298
        %v300 = vrot.slane %v285, %v299
        %v301 = vlaneseq
        %v302 = vshrl.u32 %v301, 7
        %v303 = vsub.s32 3, %v302
        %v304 = vrot.slane %v285, %v303
        %v305 = vlaneseq
        %v306 = vshrl.u32 %v305, 7
        %v307 = vsub.s32 4, %v306
        %v308 = vrot.slane %v285, %v307
        %v309 = vlaneseq
        %v310 = vshrl.u32 %v309, 7
        %v311 = vsub.s32 5, %v310
        %v312 = vrot.slane %v285, %v311
        %v313 = vlaneseq
        %v314 = vshrl.u32 %v313, 7
        %v315 = vsub.s32 6, %v314
        %v316 = vrot.slane %v285, %v315
        %v317 = vlaneseq
        %v318 = vshrl.u32 %v317, 7
        %v319 = vsub.s32 7, %v318
        %v320 = vrot.slane %v285, %v319
        %v321 = vlaneseq
        %v322 = vshrl.u32 %v321, 7
        %v323 = vsub.s32 0, %v322
        %v324 = vrot.slane %v286, %v323
        %v325 = vlaneseq
        %v326 = vshrl.u32 %v325, 7
        %v327 = vsub.s32 1, %v326
        %v328 = vrot.slane %v286, %v327
        %v329 = vlaneseq
        %v330 = vshrl.u32 %v329, 7
        %v331 = vsub.s32 2, %v330
        %v332 = vrot.slane %v286, %v331
        %v333 = vlaneseq
        %v334 = vshrl.u32 %v333, 7
        %v335 = vsub.s32 3, %v334
        %v336 = vrot.slane %v286, %v335
        %v337 = vlaneseq
        %v338 = vshrl.u32 %v337, 7
        %v339 = vsub.s32 4, %v338
        %v340 = vrot.slane %v286, %v339
        %v341 = vlaneseq
        %v342 = vshrl.u32 %v341, 7
        %v343 = vsub.s32 5, %v342
        %v344 = vrot.slane %v286, %v343
        %v345 = vlaneseq
        %v346 = vshrl.u32 %v345, 7
        %v347 = vsub.s32 6, %v346
        %v348 = vrot.slane %v286, %v347
        %v349 = vlaneseq
        %v350 = vshrl.u32 %v349, 7
        %v351 = vsub.s32 7, %v350
        %v352 = vrot.slane %v286, %v351
        %vm369 = vcmask 261120
        %v371 = vsel %vm369, %v220, 0
        %373 = vmatprep.subr.mxu0 0.0
        %374 = vmatpush1.msra.mxu0 0.0
        %375 = vmatprep.subr.mxu0 0.0
        %376 = vmatpush1.msra.mxu0 0.0
        %377 = vmatprep.subr.mxu0 0.0
        %378 = vmatpush1.msra.mxu0 0.0
        %379 = vmatprep.subr.mxu0 0.0
        %380 = vmatpush1.msra.mxu0 0.0
        %381 = vmatprep.subr.mxu0 0.0
        %382 = vmatpush1.msra.mxu0 0.0
        %383 = vmatprep.subr.mxu0 0.0
        %384 = vmatpush1.msra.mxu0 0.0
        %385 = vmatprep.subr.mxu0 0.0
        %386 = vmatpush1.msra.mxu0 0.0
        %387 = vmatprep.subr.mxu0 0.0
        %388 = vmatpush1.msra.mxu0 0.0
        %389 = vmatprep.subr.mxu0 0.0
        %390 = vmatpush1.msra.mxu0 0.0
        %391 = vmatprep.subr.mxu0 0.0
        %392 = vmatpush1.msra.mxu0 0.0
        %393 = vmatprep.subr.mxu0 0.0
        %394 = vmatpush1.msra.mxu0 0.0
        %395 = vmatprep.subr.mxu0 0.0
        %396 = vmatpush1.msra.mxu0 0.0
        %397 = vmatprep.subr.mxu0 %v270
        %398 = vmatpush1.msra.mxu0 %v269
        %399 = vmatprep.subr.mxu0 %v254
        %400 = vmatpush1.msra.mxu0 %v253
        %401 = vmatprep.subr.mxu0 %v238
        %402 = vmatpush1.msra.mxu0 %v237
        %403 = vmatprep.subr.mxu0 %v222
        %404 = vmatpush1.msra.mxu0 %v221
        %405 = vmatprep.subr.mxu0 0.0
        %406 = vmatpush2.msra.mxu0 0.0
        %407 = vmatprep.subr.mxu0 0.0
        %408 = vmatpush2.msra.mxu0 0.0
        %409 = vmatprep.subr.mxu0 0.0
        %410 = vmatpush2.msra.mxu0 0.0
        %411 = vmatprep.subr.mxu0 0.0
        %412 = vmatpush2.msra.mxu0 0.0
        %413 = vmatprep.subr.mxu0 0.0
        %414 = vmatpush2.msra.mxu0 0.0
        %415 = vmatprep.subr.mxu0 0.0
        %416 = vmatpush2.msra.mxu0 0.0
        %417 = vmatprep.subr.mxu0 0.0
        %418 = vmatpush2.msra.mxu0 0.0
        %419 = vmatprep.subr.mxu0 0.0
        %420 = vmatpush2.msra.mxu0 0.0
        %421 = vmatprep.subr.mxu0 0.0
        %422 = vmatpush2.msra.mxu0 0.0
        %423 = vmatprep.subr.mxu0 0.0
        %424 = vmatpush2.msra.mxu0 0.0
        %425 = vmatprep.subr.mxu0 0.0
        %426 = vmatpush2.msra.mxu0 0.0
        %427 = vmatprep.subr.mxu0 0.0
        %428 = vmatpush2.msra.mxu0 0.0
        %429 = vmatprep.subr.mxu0 0.0
        %430 = vmatpush2.msra.mxu0 0.0
        %431 = vmatprep.subr.mxu0 0.0
        %432 = vmatpush2.msra.mxu0 0.0
        %433 = vmatprep.subr.mxu0 0.0
        %434 = vmatpush2.msra.mxu0 0.0
        %435 = vmatprep.subr.mxu0 0.0
        %436 = vmatpush2.msra.mxu0 0.0
        %437 = vmatprep.mubr.f32.mxu0 0.0
        %438 = vmatmul.mubr.f32.gmra.mxu0 %v371
        %v439 = vpop.f32.mrf.mxu0
        %v440 = vadd.f32 %v292, %v439
        %v441 = vpop.f32.mrf.mxu0
        %v442 = vadd.f32 %v296, %v441
        %443 = vdwg.mxu0
        %444 = vmatprep.subr.mxu0 0.0
        %445 = vmatpush1.msra.mxu0 0.0
        %446 = vmatprep.subr.mxu0 0.0
        %447 = vmatpush1.msra.mxu0 0.0
        %448 = vmatprep.subr.mxu0 0.0
        %449 = vmatpush1.msra.mxu0 0.0
        %450 = vmatprep.subr.mxu0 0.0
        %451 = vmatpush1.msra.mxu0 0.0
        %452 = vmatprep.subr.mxu0 0.0
        %453 = vmatpush1.msra.mxu0 0.0
        %454 = vmatprep.subr.mxu0 0.0
        %455 = vmatpush1.msra.mxu0 0.0
        %456 = vmatprep.subr.mxu0 0.0
        %457 = vmatpush1.msra.mxu0 0.0
        %458 = vmatprep.subr.mxu0 0.0
        %459 = vmatpush1.msra.mxu0 0.0
        %460 = vmatprep.subr.mxu0 0.0
        %461 = vmatpush1.msra.mxu0 0.0
        %462 = vmatprep.subr.mxu0 0.0
        %463 = vmatpush1.msra.mxu0 0.0
        %464 = vmatprep.subr.mxu0 0.0
        %465 = vmatpush1.msra.mxu0 0.0
        %466 = vmatprep.subr.mxu0 0.0
        %467 = vmatpush1.msra.mxu0 0.0
        %468 = vmatprep.subr.mxu0 %v272
        %469 = vmatpush1.msra.mxu0 %v271
        %470 = vmatprep.subr.mxu0 %v256
        %471 = vmatpush1.msra.mxu0 %v255
        %472 = vmatprep.subr.mxu0 %v240
        %473 = vmatpush1.msra.mxu0 %v239
        %474 = vmatprep.subr.mxu0 %v224
        %475 = vmatpush1.msra.mxu0 %v223
        %476 = vmatprep.subr.mxu0 0.0
        %477 = vmatpush2.msra.mxu0 0.0
        %478 = vmatprep.subr.mxu0 0.0
        %479 = vmatpush2.msra.mxu0 0.0
        %480 = vmatprep.subr.mxu0 0.0
        %481 = vmatpush2.msra.mxu0 0.0
        %482 = vmatprep.subr.mxu0 0.0
        %483 = vmatpush2.msra.mxu0 0.0
        %484 = vmatprep.subr.mxu0 0.0
        %485 = vmatpush2.msra.mxu0 0.0
        %486 = vmatprep.subr.mxu0 0.0
        %487 = vmatpush2.msra.mxu0 0.0
        %488 = vmatprep.subr.mxu0 0.0
        %489 = vmatpush2.msra.mxu0 0.0
        %490 = vmatprep.subr.mxu0 0.0
        %491 = vmatpush2.msra.mxu0 0.0
        %492 = vmatprep.subr.mxu0 0.0
        %493 = vmatpush2.msra.mxu0 0.0
        %494 = vmatprep.subr.mxu0 0.0
        %495 = vmatpush2.msra.mxu0 0.0
        %496 = vmatprep.subr.mxu0 0.0
        %497 = vmatpush2.msra.mxu0 0.0
        %498 = vmatprep.subr.mxu0 0.0
        %499 = vmatpush2.msra.mxu0 0.0
        %500 = vmatprep.subr.mxu0 0.0
        %501 = vmatpush2.msra.mxu0 0.0
        %502 = vmatprep.subr.mxu0 0.0
        %503 = vmatpush2.msra.mxu0 0.0
        %504 = vmatprep.subr.mxu0 0.0
        %505 = vmatpush2.msra.mxu0 0.0
        %506 = vmatprep.subr.mxu0 0.0
        %507 = vmatpush2.msra.mxu0 0.0
        %508 = vmatprep.mubr.f32.mxu0 0.0
        %509 = vmatmul.mubr.f32.gmra.mxu0 %v371
        %v510 = vpop.f32.mrf.mxu0
        %v511 = vadd.f32 %v300, %v510
        %v512 = vpop.f32.mrf.mxu0
        %v513 = vadd.f32 %v304, %v512
        %514 = vdwg.mxu0
        %515 = vmatprep.subr.mxu0 0.0
        %516 = vmatpush1.msra.mxu0 0.0
        %517 = vmatprep.subr.mxu0 0.0
        %518 = vmatpush1.msra.mxu0 0.0
        %519 = vmatprep.subr.mxu0 0.0
        %520 = vmatpush1.msra.mxu0 0.0
        %521 = vmatprep.subr.mxu0 0.0
        %522 = vmatpush1.msra.mxu0 0.0
        %523 = vmatprep.subr.mxu0 0.0
        %524 = vmatpush1.msra.mxu0 0.0
        %525 = vmatprep.subr.mxu0 0.0
        %526 = vmatpush1.msra.mxu0 0.0
        %527 = vmatprep.subr.mxu0 0.0
        %528 = vmatpush1.msra.mxu0 0.0
        %529 = vmatprep.subr.mxu0 0.0
        %530 = vmatpush1.msra.mxu0 0.0
        %531 = vmatprep.subr.mxu0 0.0
        %532 = vmatpush1.msra.mxu0 0.0
        %533 = vmatprep.subr.mxu0 0.0
        %534 = vmatpush1.msra.mxu0 0.0
        %535 = vmatprep.subr.mxu0 0.0
        %536 = vmatpush1.msra.mxu0 0.0
        %537 = vmatprep.subr.mxu0 0.0
        %538 = vmatpush1.msra.mxu0 0.0
        %539 = vmatprep.subr.mxu0 %v274
        %540 = vmatpush1.msra.mxu0 %v273
        %541 = vmatprep.subr.mxu0 %v258
        %542 = vmatpush1.msra.mxu0 %v257
        %543 = vmatprep.subr.mxu0 %v242
        %544 = vmatpush1.msra.mxu0 %v241
        %545 = vmatprep.subr.mxu0 %v226
        %546 = vmatpush1.msra.mxu0 %v225
        %547 = vmatprep.subr.mxu0 0.0
        %548 = vmatpush2.msra.mxu0 0.0
        %549 = vmatprep.subr.mxu0 0.0
        %550 = vmatpush2.msra.mxu0 0.0
        %551 = vmatprep.subr.mxu0 0.0
        %552 = vmatpush2.msra.mxu0 0.0
        %553 = vmatprep.subr.mxu0 0.0
        %554 = vmatpush2.msra.mxu0 0.0
        %555 = vmatprep.subr.mxu0 0.0
        %556 = vmatpush2.msra.mxu0 0.0
        %557 = vmatprep.subr.mxu0 0.0
        %558 = vmatpush2.msra.mxu0 0.0
        %559 = vmatprep.subr.mxu0 0.0
        %560 = vmatpush2.msra.mxu0 0.0
        %561 = vmatprep.subr.mxu0 0.0
        %562 = vmatpush2.msra.mxu0 0.0
        %563 = vmatprep.subr.mxu0 0.0
        %564 = vmatpush2.msra.mxu0 0.0
        %565 = vmatprep.subr.mxu0 0.0
        %566 = vmatpush2.msra.mxu0 0.0
        %567 = vmatprep.subr.mxu0 0.0
        %568 = vmatpush2.msra.mxu0 0.0
        %569 = vmatprep.subr.mxu0 0.0
        %570 = vmatpush2.msra.mxu0 0.0
        %571 = vmatprep.subr.mxu0 0.0
        %572 = vmatpush2.msra.mxu0 0.0
        %573 = vmatprep.subr.mxu0 0.0
        %574 = vmatpush2.msra.mxu0 0.0
        %575 = vmatprep.subr.mxu0 0.0
        %576 = vmatpush2.msra.mxu0 0.0
        %577 = vmatprep.subr.mxu0 0.0
        %578 = vmatpush2.msra.mxu0 0.0
        %579 = vmatprep.mubr.f32.mxu0 0.0
        %580 = vmatmul.mubr.f32.gmra.mxu0 %v371
        %v581 = vpop.f32.mrf.mxu0
        %v582 = vadd.f32 %v308, %v581
        %v583 = vpop.f32.mrf.mxu0
        %v584 = vadd.f32 %v312, %v583
        %585 = vdwg.mxu0
        %586 = vmatprep.subr.mxu0 0.0
        %587 = vmatpush1.msra.mxu0 0.0
        %588 = vmatprep.subr.mxu0 0.0
        %589 = vmatpush1.msra.mxu0 0.0
        %590 = vmatprep.subr.mxu0 0.0
        %591 = vmatpush1.msra.mxu0 0.0
        %592 = vmatprep.subr.mxu0 0.0
        %593 = vmatpush1.msra.mxu0 0.0
        %594 = vmatprep.subr.mxu0 0.0
        %595 = vmatpush1.msra.mxu0 0.0
        %596 = vmatprep.subr.mxu0 0.0
        %597 = vmatpush1.msra.mxu0 0.0
        %598 = vmatprep.subr.mxu0 0.0
        %599 = vmatpush1.msra.mxu0 0.0
        %600 = vmatprep.subr.mxu0 0.0
        %601 = vmatpush1.msra.mxu0 0.0
        %602 = vmatprep.subr.mxu0 0.0
        %603 = vmatpush1.msra.mxu0 0.0
        %604 = vmatprep.subr.mxu0 0.0
        %605 = vmatpush1.msra.mxu0 0.0
        %606 = vmatprep.subr.mxu0 0.0
        %607 = vmatpush1.msra.mxu0 0.0
        %608 = vmatprep.subr.mxu0 0.0
        %609 = vmatpush1.msra.mxu0 0.0
        %610 = vmatprep.subr.mxu0 %v276
        %611 = vmatpush1.msra.mxu0 %v275
        %612 = vmatprep.subr.mxu0 %v260
        %613 = vmatpush1.msra.mxu0 %v259
        %614 = vmatprep.subr.mxu0 %v244
        %615 = vmatpush1.msra.mxu0 %v243
        %616 = vmatprep.subr.mxu0 %v228
        %617 = vmatpush1.msra.mxu0 %v227
        %618 = vmatprep.subr.mxu0 0.0
        %619 = vmatpush2.msra.mxu0 0.0
        %620 = vmatprep.subr.mxu0 0.0
        %621 = vmatpush2.msra.mxu0 0.0
        %622 = vmatprep.subr.mxu0 0.0
        %623 = vmatpush2.msra.mxu0 0.0
        %624 = vmatprep.subr.mxu0 0.0
        %625 = vmatpush2.msra.mxu0 0.0
        %626 = vmatprep.subr.mxu0 0.0
        %627 = vmatpush2.msra.mxu0 0.0
        %628 = vmatprep.subr.mxu0 0.0
        %629 = vmatpush2.msra.mxu0 0.0
        %630 = vmatprep.subr.mxu0 0.0
        %631 = vmatpush2.msra.mxu0 0.0
        %632 = vmatprep.subr.mxu0 0.0
        %633 = vmatpush2.msra.mxu0 0.0
        %634 = vmatprep.subr.mxu0 0.0
        %635 = vmatpush2.msra.mxu0 0.0
        %636 = vmatprep.subr.mxu0 0.0
        %637 = vmatpush2.msra.mxu0 0.0
        %638 = vmatprep.subr.mxu0 0.0
        %639 = vmatpush2.msra.mxu0 0.0
        %640 = vmatprep.subr.mxu0 0.0
        %641 = vmatpush2.msra.mxu0 0.0
        %642 = vmatprep.subr.mxu0 0.0
        %643 = vmatpush2.msra.mxu0 0.0
        %644 = vmatprep.subr.mxu0 0.0
        %645 = vmatpush2.msra.mxu0 0.0
        %646 = vmatprep.subr.mxu0 0.0
        %647 = vmatpush2.msra.mxu0 0.0
        %648 = vmatprep.subr.mxu0 0.0
        %649 = vmatpush2.msra.mxu0 0.0
        %650 = vmatprep.mubr.f32.mxu0 0.0
        %651 = vmatmul.mubr.f32.gmra.mxu0 %v371
        %v652 = vpop.f32.mrf.mxu0
        %v653 = vadd.f32 %v316, %v652
        %v654 = vpop.f32.mrf.mxu0
        %v655 = vadd.f32 %v320, %v654
        %656 = vdwg.mxu0
        %657 = vmatprep.subr.mxu0 0.0
        %658 = vmatpush1.msra.mxu0 0.0
        %659 = vmatprep.subr.mxu0 0.0
        %660 = vmatpush1.msra.mxu0 0.0
        %661 = vmatprep.subr.mxu0 0.0
        %662 = vmatpush1.msra.mxu0 0.0
        %663 = vmatprep.subr.mxu0 0.0
        %664 = vmatpush1.msra.mxu0 0.0
        %665 = vmatprep.subr.mxu0 0.0
        %666 = vmatpush1.msra.mxu0 0.0
        %667 = vmatprep.subr.mxu0 0.0
        %668 = vmatpush1.msra.mxu0 0.0
        %669 = vmatprep.subr.mxu0 0.0
        %670 = vmatpush1.msra.mxu0 0.0
        %671 = vmatprep.subr.mxu0 0.0
        %672 = vmatpush1.msra.mxu0 0.0
        %673 = vmatprep.subr.mxu0 0.0
        %674 = vmatpush1.msra.mxu0 0.0
        %675 = vmatprep.subr.mxu0 0.0
        %676 = vmatpush1.msra.mxu0 0.0
        %677 = vmatprep.subr.mxu0 0.0
        %678 = vmatpush1.msra.mxu0 0.0
        %679 = vmatprep.subr.mxu0 0.0
        %680 = vmatpush1.msra.mxu0 0.0
        %681 = vmatprep.subr.mxu0 %v278
        %682 = vmatpush1.msra.mxu0 %v277
        %683 = vmatprep.subr.mxu0 %v262
        %684 = vmatpush1.msra.mxu0 %v261
        %685 = vmatprep.subr.mxu0 %v246
        %686 = vmatpush1.msra.mxu0 %v245
        %687 = vmatprep.subr.mxu0 %v230
        %688 = vmatpush1.msra.mxu0 %v229
        %689 = vmatprep.subr.mxu0 0.0
        %690 = vmatpush2.msra.mxu0 0.0
        %691 = vmatprep.subr.mxu0 0.0
        %692 = vmatpush2.msra.mxu0 0.0
        %693 = vmatprep.subr.mxu0 0.0
        %694 = vmatpush2.msra.mxu0 0.0
        %695 = vmatprep.subr.mxu0 0.0
        %696 = vmatpush2.msra.mxu0 0.0
        %697 = vmatprep.subr.mxu0 0.0
        %698 = vmatpush2.msra.mxu0 0.0
        %699 = vmatprep.subr.mxu0 0.0
        %700 = vmatpush2.msra.mxu0 0.0
        %701 = vmatprep.subr.mxu0 0.0
        %702 = vmatpush2.msra.mxu0 0.0
        %703 = vmatprep.subr.mxu0 0.0
        %704 = vmatpush2.msra.mxu0 0.0
        %705 = vmatprep.subr.mxu0 0.0
        %706 = vmatpush2.msra.mxu0 0.0
        %707 = vmatprep.subr.mxu0 0.0
        %708 = vmatpush2.msra.mxu0 0.0
        %709 = vmatprep.subr.mxu0 0.0
        %710 = vmatpush2.msra.mxu0 0.0
        %711 = vmatprep.subr.mxu0 0.0
        %712 = vmatpush2.msra.mxu0 0.0
        %713 = vmatprep.subr.mxu0 0.0
        %714 = vmatpush2.msra.mxu0 0.0
        %715 = vmatprep.subr.mxu0 0.0
        %716 = vmatpush2.msra.mxu0 0.0
        %717 = vmatprep.subr.mxu0 0.0
        %718 = vmatpush2.msra.mxu0 0.0
        %719 = vmatprep.subr.mxu0 0.0
        %720 = vmatpush2.msra.mxu0 0.0
        %721 = vmatprep.mubr.f32.mxu0 0.0
        %722 = vmatmul.mubr.f32.gmra.mxu0 %v371
        %v723 = vpop.f32.mrf.mxu0
        %v724 = vadd.f32 %v324, %v723
        %v725 = vpop.f32.mrf.mxu0
        %v726 = vadd.f32 %v328, %v725
        %727 = vdwg.mxu0
        %728 = vmatprep.subr.mxu0 0.0
        %729 = vmatpush1.msra.mxu0 0.0
        %730 = vmatprep.subr.mxu0 0.0
        %731 = vmatpush1.msra.mxu0 0.0
        %732 = vmatprep.subr.mxu0 0.0
        %733 = vmatpush1.msra.mxu0 0.0
        %734 = vmatprep.subr.mxu0 0.0
        %735 = vmatpush1.msra.mxu0 0.0
        %736 = vmatprep.subr.mxu0 0.0
        %737 = vmatpush1.msra.mxu0 0.0
        %738 = vmatprep.subr.mxu0 0.0
        %739 = vmatpush1.msra.mxu0 0.0
        %740 = vmatprep.subr.mxu0 0.0
        %741 = vmatpush1.msra.mxu0 0.0
        %742 = vmatprep.subr.mxu0 0.0
        %743 = vmatpush1.msra.mxu0 0.0
        %744 = vmatprep.subr.mxu0 0.0
        %745 = vmatpush1.msra.mxu0 0.0
        %746 = vmatprep.subr.mxu0 0.0
        %747 = vmatpush1.msra.mxu0 0.0
        %748 = vmatprep.subr.mxu0 0.0
        %749 = vmatpush1.msra.mxu0 0.0
        %750 = vmatprep.subr.mxu0 0.0
        %751 = vmatpush1.msra.mxu0 0.0
        %752 = vmatprep.subr.mxu0 %v280
        %753 = vmatpush1.msra.mxu0 %v279
        %754 = vmatprep.subr.mxu0 %v264
        %755 = vmatpush1.msra.mxu0 %v263
        %756 = vmatprep.subr.mxu0 %v248
        %757 = vmatpush1.msra.mxu0 %v247
        %758 = vmatprep.subr.mxu0 %v232
        %759 = vmatpush1.msra.mxu0 %v231
        %760 = vmatprep.subr.mxu0 0.0
        %761 = vmatpush2.msra.mxu0 0.0
        %762 = vmatprep.subr.mxu0 0.0
        %763 = vmatpush2.msra.mxu0 0.0
        %764 = vmatprep.subr.mxu0 0.0
        %765 = vmatpush2.msra.mxu0 0.0
        %766 = vmatprep.subr.mxu0 0.0
        %767 = vmatpush2.msra.mxu0 0.0
        %768 = vmatprep.subr.mxu0 0.0
        %769 = vmatpush2.msra.mxu0 0.0
        %770 = vmatprep.subr.mxu0 0.0
        %771 = vmatpush2.msra.mxu0 0.0
        %772 = vmatprep.subr.mxu0 0.0
        %773 = vmatpush2.msra.mxu0 0.0
        %774 = vmatprep.subr.mxu0 0.0
        %775 = vmatpush2.msra.mxu0 0.0
        %776 = vmatprep.subr.mxu0 0.0
        %777 = vmatpush2.msra.mxu0 0.0
        %778 = vmatprep.subr.mxu0 0.0
        %779 = vmatpush2.msra.mxu0 0.0
        %780 = vmatprep.subr.mxu0 0.0
        %781 = vmatpush2.msra.mxu0 0.0
        %782 = vmatprep.subr.mxu0 0.0
        %783 = vmatpush2.msra.mxu0 0.0
        %784 = vmatprep.subr.mxu0 0.0
        %785 = vmatpush2.msra.mxu0 0.0
        %786 = vmatprep.subr.mxu0 0.0
        %787 = vmatpush2.msra.mxu0 0.0
        %788 = vmatprep.subr.mxu0 0.0
        %789 = vmatpush2.msra.mxu0 0.0
        %790 = vmatprep.subr.mxu0 0.0
        %791 = vmatpush2.msra.mxu0 0.0
        %792 = vmatprep.mubr.f32.mxu0 0.0
        %793 = vmatmul.mubr.f32.gmra.mxu0 %v371
        %v794 = vpop.f32.mrf.mxu0
        %v795 = vadd.f32 %v332, %v794
        %v796 = vpop.f32.mrf.mxu0
        %v797 = vadd.f32 %v336, %v796
        %798 = vdwg.mxu0
        %799 = vmatprep.subr.mxu0 0.0
        %800 = vmatpush1.msra.mxu0 0.0
        %801 = vmatprep.subr.mxu0 0.0
        %802 = vmatpush1.msra.mxu0 0.0
        %803 = vmatprep.subr.mxu0 0.0
        %804 = vmatpush1.msra.mxu0 0.0
        %805 = vmatprep.subr.mxu0 0.0
        %806 = vmatpush1.msra.mxu0 0.0
        %807 = vmatprep.subr.mxu0 0.0
        %808 = vmatpush1.msra.mxu0 0.0
        %809 = vmatprep.subr.mxu0 0.0
        %810 = vmatpush1.msra.mxu0 0.0
        %811 = vmatprep.subr.mxu0 0.0
        %812 = vmatpush1.msra.mxu0 0.0
        %813 = vmatprep.subr.mxu0 0.0
        %814 = vmatpush1.msra.mxu0 0.0
        %815 = vmatprep.subr.mxu0 0.0
        %816 = vmatpush1.msra.mxu0 0.0
        %817 = vmatprep.subr.mxu0 0.0
        %818 = vmatpush1.msra.mxu0 0.0
        %819 = vmatprep.subr.mxu0 0.0
        %820 = vmatpush1.msra.mxu0 0.0
        %821 = vmatprep.subr.mxu0 0.0
        %822 = vmatpush1.msra.mxu0 0.0
        %823 = vmatprep.subr.mxu0 %v282
        %824 = vmatpush1.msra.mxu0 %v281
        %825 = vmatprep.subr.mxu0 %v266
        %826 = vmatpush1.msra.mxu0 %v265
        %827 = vmatprep.subr.mxu0 %v250
        %828 = vmatpush1.msra.mxu0 %v249
        %829 = vmatprep.subr.mxu0 %v234
        %830 = vmatpush1.msra.mxu0 %v233
        %831 = vmatprep.subr.mxu0 0.0
        %832 = vmatpush2.msra.mxu0 0.0
        %833 = vmatprep.subr.mxu0 0.0
        %834 = vmatpush2.msra.mxu0 0.0
        %835 = vmatprep.subr.mxu0 0.0
        %836 = vmatpush2.msra.mxu0 0.0
        %837 = vmatprep.subr.mxu0 0.0
        %838 = vmatpush2.msra.mxu0 0.0
        %839 = vmatprep.subr.mxu0 0.0
        %840 = vmatpush2.msra.mxu0 0.0
        %841 = vmatprep.subr.mxu0 0.0
        %842 = vmatpush2.msra.mxu0 0.0
        %843 = vmatprep.subr.mxu0 0.0
        %844 = vmatpush2.msra.mxu0 0.0
        %845 = vmatprep.subr.mxu0 0.0
        %846 = vmatpush2.msra.mxu0 0.0
        %847 = vmatprep.subr.mxu0 0.0
        %848 = vmatpush2.msra.mxu0 0.0
        %849 = vmatprep.subr.mxu0 0.0
        %850 = vmatpush2.msra.mxu0 0.0
        %851 = vmatprep.subr.mxu0 0.0
        %852 = vmatpush2.msra.mxu0 0.0
        %853 = vmatprep.subr.mxu0 0.0
        %854 = vmatpush2.msra.mxu0 0.0
        %855 = vmatprep.subr.mxu0 0.0
        %856 = vmatpush2.msra.mxu0 0.0
        %857 = vmatprep.subr.mxu0 0.0
        %858 = vmatpush2.msra.mxu0 0.0
        %859 = vmatprep.subr.mxu0 0.0
        %860 = vmatpush2.msra.mxu0 0.0
        %861 = vmatprep.subr.mxu0 0.0
        %862 = vmatpush2.msra.mxu0 0.0
        %863 = vmatprep.mubr.f32.mxu0 0.0
        %864 = vmatmul.mubr.f32.gmra.mxu0 %v371
        %v865 = vpop.f32.mrf.mxu0
        %v866 = vadd.f32 %v340, %v865
        %v867 = vpop.f32.mrf.mxu0
        %v868 = vadd.f32 %v344, %v867
        %869 = vdwg.mxu0
        %870 = vmatprep.subr.mxu0 0.0
        %871 = vmatpush1.msra.mxu0 0.0
        %872 = vmatprep.subr.mxu0 0.0
        %873 = vmatpush1.msra.mxu0 0.0
        %874 = vmatprep.subr.mxu0 0.0
        %875 = vmatpush1.msra.mxu0 0.0
        %876 = vmatprep.subr.mxu0 0.0
        %877 = vmatpush1.msra.mxu0 0.0
        %878 = vmatprep.subr.mxu0 0.0
        %879 = vmatpush1.msra.mxu0 0.0
        %880 = vmatprep.subr.mxu0 0.0
        %881 = vmatpush1.msra.mxu0 0.0
        %882 = vmatprep.subr.mxu0 0.0
        %883 = vmatpush1.msra.mxu0 0.0
        %884 = vmatprep.subr.mxu0 0.0
        %885 = vmatpush1.msra.mxu0 0.0
        %886 = vmatprep.subr.mxu0 0.0
        %887 = vmatpush1.msra.mxu0 0.0
        %888 = vmatprep.subr.mxu0 0.0
        %889 = vmatpush1.msra.mxu0 0.0
        %890 = vmatprep.subr.mxu0 0.0
        %891 = vmatpush1.msra.mxu0 0.0
        %892 = vmatprep.subr.mxu0 0.0
        %893 = vmatpush1.msra.mxu0 0.0
        %894 = vmatprep.subr.mxu0 %v284
        %895 = vmatpush1.msra.mxu0 %v283
        %896 = vmatprep.subr.mxu0 %v268
        %897 = vmatpush1.msra.mxu0 %v267
        %898 = vmatprep.subr.mxu0 %v252
        %899 = vmatpush1.msra.mxu0 %v251
        %900 = vmatprep.subr.mxu0 %v236
        %901 = vmatpush1.msra.mxu0 %v235
        %902 = vmatprep.subr.mxu0 0.0
        %903 = vmatpush2.msra.mxu0 0.0
        %904 = vmatprep.subr.mxu0 0.0
        %905 = vmatpush2.msra.mxu0 0.0
        %906 = vmatprep.subr.mxu0 0.0
        %907 = vmatpush2.msra.mxu0 0.0
        %908 = vmatprep.subr.mxu0 0.0
        %909 = vmatpush2.msra.mxu0 0.0
        %910 = vmatprep.subr.mxu0 0.0
        %911 = vmatpush2.msra.mxu0 0.0
        %912 = vmatprep.subr.mxu0 0.0
        %913 = vmatpush2.msra.mxu0 0.0
        %914 = vmatprep.subr.mxu0 0.0
        %915 = vmatpush2.msra.mxu0 0.0
        %916 = vmatprep.subr.mxu0 0.0
        %917 = vmatpush2.msra.mxu0 0.0
        %918 = vmatprep.subr.mxu0 0.0
        %919 = vmatpush2.msra.mxu0 0.0
        %920 = vmatprep.subr.mxu0 0.0
        %921 = vmatpush2.msra.mxu0 0.0
        %922 = vmatprep.subr.mxu0 0.0
        %923 = vmatpush2.msra.mxu0 0.0
        %924 = vmatprep.subr.mxu0 0.0
        %925 = vmatpush2.msra.mxu0 0.0
        %926 = vmatprep.subr.mxu0 0.0
        %927 = vmatpush2.msra.mxu0 0.0
        %928 = vmatprep.subr.mxu0 0.0
        %929 = vmatpush2.msra.mxu0 0.0
        %930 = vmatprep.subr.mxu0 0.0
        %931 = vmatpush2.msra.mxu0 0.0
        %932 = vmatprep.subr.mxu0 0.0
        %933 = vmatpush2.msra.mxu0 0.0
        %934 = vmatprep.mubr.f32.mxu0 0.0
        %935 = vmatmul.mubr.f32.gmra.mxu0 %v371
        %v936 = vpop.f32.mrf.mxu0
        %v937 = vadd.f32 %v348, %v936
        %v938 = vpop.f32.mrf.mxu0
        %v939 = vadd.f32 %v352, %v938
        %940 = vdwg.mxu0
        %v941 = vmax.f32 %v440, 0.0
        %v942 = vmax.f32 %v442, 0.0
        %v943 = vmax.f32 %v511, 0.0
        %v944 = vmax.f32 %v513, 0.0
        %v945 = vmax.f32 %v582, 0.0
        %v946 = vmax.f32 %v584, 0.0
        %v947 = vmax.f32 %v653, 0.0
        %v948 = vmax.f32 %v655, 0.0
        %v949 = vmax.f32 %v724, 0.0
        %v950 = vmax.f32 %v726, 0.0
        %v951 = vmax.f32 %v795, 0.0
        %v952 = vmax.f32 %v797, 0.0
        %v953 = vmax.f32 %v866, 0.0
        %v954 = vmax.f32 %v868, 0.0
        %v955 = vmax.f32 %v937, 0.0
        %v956 = vmax.f32 %v939, 0.0
        %v957 = vld [vmem:[%s3] sm:$0xff]
        %v958 = vld [vmem:[%s3 + $0x8] sm:$0xff]
        %v959 = vld [vmem:[%s3 + $0x10] sm:$0xff]
        %v960 = vld [vmem:[%s3 + $0x18] sm:$0xff]
        %v961 = vld [vmem:[%s3 + $0x20] sm:$0xff]
        %v962 = vld [vmem:[%s3 + $0x28] sm:$0xff]
        %v963 = vld [vmem:[%s3 + $0x30] sm:$0xff]
        %v964 = vld [vmem:[%s3 + $0x38] sm:$0xff]
        %v965 = vld [vmem:[%s3 + $0x40] sm:$0xff]
        %v966 = vld [vmem:[%s3 + $0x48] sm:$0xff]
        %v967 = vld [vmem:[%s3 + $0x50] sm:$0xff]
        %v968 = vld [vmem:[%s3 + $0x58] sm:$0xff]
        %v969 = vld [vmem:[%s3 + $0x60] sm:$0xff]
        %v970 = vld [vmem:[%s3 + $0x68] sm:$0xff]
        %v971 = vld [vmem:[%s3 + $0x70] sm:$0xff]
        %v972 = vld [vmem:[%s3 + $0x78] sm:$0xff]
        %v973 = vld [vmem:[%s3 + $0x80] sm:$0xff]
        %v974 = vld [vmem:[%s3 + $0x88] sm:$0xff]
        %v975 = vld [vmem:[%s3 + $0x90] sm:$0xff]
        %v976 = vld [vmem:[%s3 + $0x98] sm:$0xff]
        %v977 = vld [vmem:[%s3 + $0xa0] sm:$0xff]
        %v978 = vld [vmem:[%s3 + $0xa8] sm:$0xff]
        %v979 = vld [vmem:[%s3 + $0xb0] sm:$0xff]
        %v980 = vld [vmem:[%s3 + $0xb8] sm:$0xff]
        %v981 = vld [vmem:[%s3 + $0xc0] sm:$0xff]
        %v982 = vld [vmem:[%s3 + $0xc8] sm:$0xff]
        %v983 = vld [vmem:[%s3 + $0xd0] sm:$0xff]
        %v984 = vld [vmem:[%s3 + $0xd8] sm:$0xff]
        %v985 = vld [vmem:[%s3 + $0xe0] sm:$0xff]
        %v986 = vld [vmem:[%s3 + $0xe8] sm:$0xff]
        %v987 = vld [vmem:[%s3 + $0xf0] sm:$0xff]
        %v988 = vld [vmem:[%s3 + $0xf8] sm:$0xff]
        %v989 = vld [vmem:[%s3 + $0x100] sm:$0xff]
        %v990 = vld [vmem:[%s3 + $0x108] sm:$0xff]
        %v991 = vld [vmem:[%s3 + $0x110] sm:$0xff]
        %v992 = vld [vmem:[%s3 + $0x118] sm:$0xff]
        %v993 = vld [vmem:[%s3 + $0x120] sm:$0xff]
        %v994 = vld [vmem:[%s3 + $0x128] sm:$0xff]
        %v995 = vld [vmem:[%s3 + $0x130] sm:$0xff]
        %v996 = vld [vmem:[%s3 + $0x138] sm:$0xff]
        %v997 = vld [vmem:[%s3 + $0x140] sm:$0xff]
        %v998 = vld [vmem:[%s3 + $0x148] sm:$0xff]
        %v999 = vld [vmem:[%s3 + $0x150] sm:$0xff]
        %v1000 = vld [vmem:[%s3 + $0x158] sm:$0xff]
        %v1001 = vld [vmem:[%s3 + $0x160] sm:$0xff]
        %v1002 = vld [vmem:[%s3 + $0x168] sm:$0xff]
        %v1003 = vld [vmem:[%s3 + $0x170] sm:$0xff]
        %v1004 = vld [vmem:[%s3 + $0x178] sm:$0xff]
        %v1005 = vld [vmem:[%s3 + $0x180] sm:$0xff]
        %v1006 = vld [vmem:[%s3 + $0x188] sm:$0xff]
        %v1007 = vld [vmem:[%s3 + $0x190] sm:$0xff]
        %v1008 = vld [vmem:[%s3 + $0x198] sm:$0xff]
        %v1009 = vld [vmem:[%s3 + $0x1a0] sm:$0xff]
        %v1010 = vld [vmem:[%s3 + $0x1a8] sm:$0xff]
        %v1011 = vld [vmem:[%s3 + $0x1b0] sm:$0xff]
        %v1012 = vld [vmem:[%s3 + $0x1b8] sm:$0xff]
        %v1013 = vld [vmem:[%s3 + $0x1c0] sm:$0xff]
        %v1014 = vld [vmem:[%s3 + $0x1c8] sm:$0xff]
        %v1015 = vld [vmem:[%s3 + $0x1d0] sm:$0xff]
        %v1016 = vld [vmem:[%s3 + $0x1d8] sm:$0xff]
        %v1017 = vld [vmem:[%s3 + $0x1e0] sm:$0xff]
        %v1018 = vld [vmem:[%s3 + $0x1e8] sm:$0xff]
        %v1019 = vld [vmem:[%s3 + $0x1f0] sm:$0xff]
        %v1020 = vld [vmem:[%s3 + $0x1f8] sm:$0xff]
        %v1021 = vld [vmem:[%s3 + $0x200] sm:$0xff]
        %v1022 = vld [vmem:[%s3 + $0x208] sm:$0xff]
        %v1023 = vld [vmem:[%s3 + $0x210] sm:$0xff]
        %v1024 = vld [vmem:[%s3 + $0x218] sm:$0xff]
        %v1025 = vld [vmem:[%s3 + $0x220] sm:$0xff]
        %v1026 = vld [vmem:[%s3 + $0x228] sm:$0xff]
        %v1027 = vld [vmem:[%s3 + $0x230] sm:$0xff]
        %v1028 = vld [vmem:[%s3 + $0x238] sm:$0xff]
        %v1029 = vld [vmem:[%s3 + $0x240] sm:$0xff]
        %v1030 = vld [vmem:[%s3 + $0x248] sm:$0xff]
        %v1031 = vld [vmem:[%s3 + $0x250] sm:$0xff]
        %v1032 = vld [vmem:[%s3 + $0x258] sm:$0xff]
        %v1033 = vld [vmem:[%s3 + $0x260] sm:$0xff]
        %v1034 = vld [vmem:[%s3 + $0x268] sm:$0xff]
        %v1035 = vld [vmem:[%s3 + $0x270] sm:$0xff]
        %v1036 = vld [vmem:[%s3 + $0x278] sm:$0xff]
        %v1037 = vld [vmem:[%s3 + $0x280] sm:$0xff]
        %v1038 = vld [vmem:[%s3 + $0x288] sm:$0xff]
        %v1039 = vld [vmem:[%s3 + $0x290] sm:$0xff]
        %v1040 = vld [vmem:[%s3 + $0x298] sm:$0xff]
        %v1041 = vld [vmem:[%s3 + $0x2a0] sm:$0xff]
        %v1042 = vld [vmem:[%s3 + $0x2a8] sm:$0xff]
        %v1043 = vld [vmem:[%s3 + $0x2b0] sm:$0xff]
        %v1044 = vld [vmem:[%s3 + $0x2b8] sm:$0xff]
        %v1045 = vld [vmem:[%s3 + $0x2c0] sm:$0xff]
        %v1046 = vld [vmem:[%s3 + $0x2c8] sm:$0xff]
        %v1047 = vld [vmem:[%s3 + $0x2d0] sm:$0xff]
        %v1048 = vld [vmem:[%s3 + $0x2d8] sm:$0xff]
        %v1049 = vld [vmem:[%s3 + $0x2e0] sm:$0xff]
        %v1050 = vld [vmem:[%s3 + $0x2e8] sm:$0xff]
        %v1051 = vld [vmem:[%s3 + $0x2f0] sm:$0xff]
        %v1052 = vld [vmem:[%s3 + $0x2f8] sm:$0xff]
        %v1053 = vld [vmem:[%s3 + $0x300] sm:$0xff]
        %v1054 = vld [vmem:[%s3 + $0x308] sm:$0xff]
        %v1055 = vld [vmem:[%s3 + $0x310] sm:$0xff]
        %v1056 = vld [vmem:[%s3 + $0x318] sm:$0xff]
        %v1057 = vld [vmem:[%s3 + $0x320] sm:$0xff]
        %v1058 = vld [vmem:[%s3 + $0x328] sm:$0xff]
        %v1059 = vld [vmem:[%s3 + $0x330] sm:$0xff]
        %v1060 = vld [vmem:[%s3 + $0x338] sm:$0xff]
        %v1061 = vld [vmem:[%s3 + $0x340] sm:$0xff]
        %v1062 = vld [vmem:[%s3 + $0x348] sm:$0xff]
        %v1063 = vld [vmem:[%s3 + $0x350] sm:$0xff]
        %v1064 = vld [vmem:[%s3 + $0x358] sm:$0xff]
        %v1065 = vld [vmem:[%s3 + $0x360] sm:$0xff]
        %v1066 = vld [vmem:[%s3 + $0x368] sm:$0xff]
        %v1067 = vld [vmem:[%s3 + $0x370] sm:$0xff]
        %v1068 = vld [vmem:[%s3 + $0x378] sm:$0xff]
        %v1069 = vld [vmem:[%s3 + $0x380] sm:$0xff]
        %v1070 = vld [vmem:[%s3 + $0x388] sm:$0xff]
        %v1071 = vld [vmem:[%s3 + $0x390] sm:$0xff]
        %v1072 = vld [vmem:[%s3 + $0x398] sm:$0xff]
        %v1073 = vld [vmem:[%s3 + $0x3a0] sm:$0xff]
        %v1074 = vld [vmem:[%s3 + $0x3a8] sm:$0xff]
        %v1075 = vld [vmem:[%s3 + $0x3b0] sm:$0xff]
        %v1076 = vld [vmem:[%s3 + $0x3b8] sm:$0xff]
        %v1077 = vld [vmem:[%s3 + $0x3c0] sm:$0xff]
        %v1078 = vld [vmem:[%s3 + $0x3c8] sm:$0xff]
        %v1079 = vld [vmem:[%s3 + $0x3d0] sm:$0xff]
        %v1080 = vld [vmem:[%s3 + $0x3d8] sm:$0xff]
        %v1081 = vld [vmem:[%s3 + $0x3e0] sm:$0xff]
        %v1082 = vld [vmem:[%s3 + $0x3e8] sm:$0xff]
        %v1083 = vld [vmem:[%s3 + $0x3f0] sm:$0xff]
        %v1084 = vld [vmem:[%s3 + $0x3f8] sm:$0xff]
        %v1085 = vld [vmem:[%s3 + $0x400] sm:$0xff]
        %v1086 = vld [vmem:[%s3 + $0x408] sm:$0xff]
        %v1087 = vld [vmem:[%s3 + $0x410] sm:$0xff]
        %v1088 = vld [vmem:[%s3 + $0x418] sm:$0xff]
        %v1089 = vld [vmem:[%s3 + $0x420] sm:$0xff]
        %v1090 = vld [vmem:[%s3 + $0x428] sm:$0xff]
        %v1091 = vld [vmem:[%s3 + $0x430] sm:$0xff]
        %v1092 = vld [vmem:[%s3 + $0x438] sm:$0xff]
        %v1093 = vld [vmem:[%s3 + $0x440] sm:$0xff]
        %v1094 = vld [vmem:[%s3 + $0x448] sm:$0xff]
        %v1095 = vld [vmem:[%s3 + $0x450] sm:$0xff]
        %v1096 = vld [vmem:[%s3 + $0x458] sm:$0xff]
        %v1097 = vld [vmem:[%s3 + $0x460] sm:$0xff]
        %v1098 = vld [vmem:[%s3 + $0x468] sm:$0xff]
        %v1099 = vld [vmem:[%s3 + $0x470] sm:$0xff]
        %v1100 = vld [vmem:[%s3 + $0x478] sm:$0xff]
        %v1101 = vld [vmem:[%s3 + $0x480] sm:$0xff]
        %v1102 = vld [vmem:[%s3 + $0x488] sm:$0xff]
        %v1103 = vld [vmem:[%s3 + $0x490] sm:$0xff]
        %v1104 = vld [vmem:[%s3 + $0x498] sm:$0xff]
        %v1105 = vld [vmem:[%s3 + $0x4a0] sm:$0xff]
        %v1106 = vld [vmem:[%s3 + $0x4a8] sm:$0xff]
        %v1107 = vld [vmem:[%s3 + $0x4b0] sm:$0xff]
        %v1108 = vld [vmem:[%s3 + $0x4b8] sm:$0xff]
        %v1109 = vld [vmem:[%s3 + $0x4c0] sm:$0xff]
        %v1110 = vld [vmem:[%s3 + $0x4c8] sm:$0xff]
        %v1111 = vld [vmem:[%s3 + $0x4d0] sm:$0xff]
        %v1112 = vld [vmem:[%s3 + $0x4d8] sm:$0xff]
        %v1113 = vld [vmem:[%s3 + $0x4e0] sm:$0xff]
        %v1114 = vld [vmem:[%s3 + $0x4e8] sm:$0xff]
        %v1115 = vld [vmem:[%s3 + $0x4f0] sm:$0xff]
        %v1116 = vld [vmem:[%s3 + $0x4f8] sm:$0xff]
        %v1117 = vld [vmem:[%s3 + $0x500] sm:$0xff]
        %v1118 = vld [vmem:[%s3 + $0x508] sm:$0xff]
        %v1119 = vld [vmem:[%s3 + $0x510] sm:$0xff]
        %v1120 = vld [vmem:[%s3 + $0x518] sm:$0xff]
        %v1121 = vld [vmem:[%s3 + $0x520] sm:$0xff]
        %v1122 = vld [vmem:[%s3 + $0x528] sm:$0xff]
        %v1123 = vld [vmem:[%s3 + $0x530] sm:$0xff]
        %v1124 = vld [vmem:[%s3 + $0x538] sm:$0xff]
        %v1125 = vld [vmem:[%s3 + $0x540] sm:$0xff]
        %v1126 = vld [vmem:[%s3 + $0x548] sm:$0xff]
        %v1127 = vld [vmem:[%s3 + $0x550] sm:$0xff]
        %v1128 = vld [vmem:[%s3 + $0x558] sm:$0xff]
        %v1129 = vld [vmem:[%s3 + $0x560] sm:$0xff]
        %v1130 = vld [vmem:[%s3 + $0x568] sm:$0xff]
        %v1131 = vld [vmem:[%s3 + $0x570] sm:$0xff]
        %v1132 = vld [vmem:[%s3 + $0x578] sm:$0xff]
        %v1133 = vld [vmem:[%s3 + $0x580] sm:$0xff]
        %v1134 = vld [vmem:[%s3 + $0x588] sm:$0xff]
        %v1135 = vld [vmem:[%s3 + $0x590] sm:$0xff]
        %v1136 = vld [vmem:[%s3 + $0x598] sm:$0xff]
        %v1137 = vld [vmem:[%s3 + $0x5a0] sm:$0xff]
        %v1138 = vld [vmem:[%s3 + $0x5a8] sm:$0xff]
        %v1139 = vld [vmem:[%s3 + $0x5b0] sm:$0xff]
        %v1140 = vld [vmem:[%s3 + $0x5b8] sm:$0xff]
        %v1141 = vld [vmem:[%s3 + $0x5c0] sm:$0xff]
        %v1142 = vld [vmem:[%s3 + $0x5c8] sm:$0xff]
        %v1143 = vld [vmem:[%s3 + $0x5d0] sm:$0xff]
        %v1144 = vld [vmem:[%s3 + $0x5d8] sm:$0xff]
        %v1145 = vld [vmem:[%s3 + $0x5e0] sm:$0xff]
        %v1146 = vld [vmem:[%s3 + $0x5e8] sm:$0xff]
        %v1147 = vld [vmem:[%s3 + $0x5f0] sm:$0xff]
        %v1148 = vld [vmem:[%s3 + $0x5f8] sm:$0xff]
        %v1149 = vld [vmem:[%s3 + $0x600] sm:$0xff]
        %v1150 = vld [vmem:[%s3 + $0x608] sm:$0xff]
        %v1151 = vld [vmem:[%s3 + $0x610] sm:$0xff]
        %v1152 = vld [vmem:[%s3 + $0x618] sm:$0xff]
        %v1153 = vld [vmem:[%s3 + $0x620] sm:$0xff]
        %v1154 = vld [vmem:[%s3 + $0x628] sm:$0xff]
        %v1155 = vld [vmem:[%s3 + $0x630] sm:$0xff]
        %v1156 = vld [vmem:[%s3 + $0x638] sm:$0xff]
        %v1157 = vld [vmem:[%s3 + $0x640] sm:$0xff]
        %v1158 = vld [vmem:[%s3 + $0x648] sm:$0xff]
        %v1159 = vld [vmem:[%s3 + $0x650] sm:$0xff]
        %v1160 = vld [vmem:[%s3 + $0x658] sm:$0xff]
        %v1161 = vld [vmem:[%s3 + $0x660] sm:$0xff]
        %v1162 = vld [vmem:[%s3 + $0x668] sm:$0xff]
        %v1163 = vld [vmem:[%s3 + $0x670] sm:$0xff]
        %v1164 = vld [vmem:[%s3 + $0x678] sm:$0xff]
        %v1165 = vld [vmem:[%s3 + $0x680] sm:$0xff]
        %v1166 = vld [vmem:[%s3 + $0x688] sm:$0xff]
        %v1167 = vld [vmem:[%s3 + $0x690] sm:$0xff]
        %v1168 = vld [vmem:[%s3 + $0x698] sm:$0xff]
        %v1169 = vld [vmem:[%s3 + $0x6a0] sm:$0xff]
        %v1170 = vld [vmem:[%s3 + $0x6a8] sm:$0xff]
        %v1171 = vld [vmem:[%s3 + $0x6b0] sm:$0xff]
        %v1172 = vld [vmem:[%s3 + $0x6b8] sm:$0xff]
        %v1173 = vld [vmem:[%s3 + $0x6c0] sm:$0xff]
        %v1174 = vld [vmem:[%s3 + $0x6c8] sm:$0xff]
        %v1175 = vld [vmem:[%s3 + $0x6d0] sm:$0xff]
        %v1176 = vld [vmem:[%s3 + $0x6d8] sm:$0xff]
        %v1177 = vld [vmem:[%s3 + $0x6e0] sm:$0xff]
        %v1178 = vld [vmem:[%s3 + $0x6e8] sm:$0xff]
        %v1179 = vld [vmem:[%s3 + $0x6f0] sm:$0xff]
        %v1180 = vld [vmem:[%s3 + $0x6f8] sm:$0xff]
        %v1181 = vld [vmem:[%s3 + $0x700] sm:$0xff]
        %v1182 = vld [vmem:[%s3 + $0x708] sm:$0xff]
        %v1183 = vld [vmem:[%s3 + $0x710] sm:$0xff]
        %v1184 = vld [vmem:[%s3 + $0x718] sm:$0xff]
        %v1185 = vld [vmem:[%s3 + $0x720] sm:$0xff]
        %v1186 = vld [vmem:[%s3 + $0x728] sm:$0xff]
        %v1187 = vld [vmem:[%s3 + $0x730] sm:$0xff]
        %v1188 = vld [vmem:[%s3 + $0x738] sm:$0xff]
        %v1189 = vld [vmem:[%s3 + $0x740] sm:$0xff]
        %v1190 = vld [vmem:[%s3 + $0x748] sm:$0xff]
        %v1191 = vld [vmem:[%s3 + $0x750] sm:$0xff]
        %v1192 = vld [vmem:[%s3 + $0x758] sm:$0xff]
        %v1193 = vld [vmem:[%s3 + $0x760] sm:$0xff]
        %v1194 = vld [vmem:[%s3 + $0x768] sm:$0xff]
        %v1195 = vld [vmem:[%s3 + $0x770] sm:$0xff]
        %v1196 = vld [vmem:[%s3 + $0x778] sm:$0xff]
        %v1197 = vld [vmem:[%s3 + $0x780] sm:$0xff]
        %v1198 = vld [vmem:[%s3 + $0x788] sm:$0xff]
        %v1199 = vld [vmem:[%s3 + $0x790] sm:$0xff]
        %v1200 = vld [vmem:[%s3 + $0x798] sm:$0xff]
        %v1201 = vld [vmem:[%s3 + $0x7a0] sm:$0xff]
        %v1202 = vld [vmem:[%s3 + $0x7a8] sm:$0xff]
        %v1203 = vld [vmem:[%s3 + $0x7b0] sm:$0xff]
        %v1204 = vld [vmem:[%s3 + $0x7b8] sm:$0xff]
        %v1205 = vld [vmem:[%s3 + $0x7c0] sm:$0xff]
        %v1206 = vld [vmem:[%s3 + $0x7c8] sm:$0xff]
        %v1207 = vld [vmem:[%s3 + $0x7d0] sm:$0xff]
        %v1208 = vld [vmem:[%s3 + $0x7d8] sm:$0xff]
        %v1209 = vld [vmem:[%s3 + $0x7e0] sm:$0xff]
        %v1210 = vld [vmem:[%s3 + $0x7e8] sm:$0xff]
        %v1211 = vld [vmem:[%s3 + $0x7f0] sm:$0xff]
        %v1212 = vld [vmem:[%s3 + $0x7f8] sm:$0xff]
        %v1213 = vld [vmem:[%s4] sm:$0x1]
        %v1215 = vlaneseq
        %v1216 = vshrl.u32 %v1215, 7
        %v1217 = vsub.s32 0, %v1216
        %v1218 = vrot.slane %v1213, %v1217
        %1220 = vmatprep.subr.mxu0 0.0
        %1221 = vmatpush1.msra.mxu0 %v972
        %1222 = vmatprep.subr.mxu0 0.0
        %1223 = vmatpush1.msra.mxu0 %v971
        %1224 = vmatprep.subr.mxu0 0.0
        %1225 = vmatpush1.msra.mxu0 %v970
        %1226 = vmatprep.subr.mxu0 0.0
        %1227 = vmatpush1.msra.mxu0 %v969
        %1228 = vmatprep.subr.mxu0 0.0
        %1229 = vmatpush1.msra.mxu0 %v968
        %1230 = vmatprep.subr.mxu0 0.0
        %1231 = vmatpush1.msra.mxu0 %v967
        %1232 = vmatprep.subr.mxu0 0.0
        %1233 = vmatpush1.msra.mxu0 %v966
        %1234 = vmatprep.subr.mxu0 0.0
        %1235 = vmatpush1.msra.mxu0 %v965
        %1236 = vmatprep.subr.mxu0 0.0
        %1237 = vmatpush1.msra.mxu0 %v964
        %1238 = vmatprep.subr.mxu0 0.0
        %1239 = vmatpush1.msra.mxu0 %v963
        %1240 = vmatprep.subr.mxu0 0.0
        %1241 = vmatpush1.msra.mxu0 %v962
        %1242 = vmatprep.subr.mxu0 0.0
        %1243 = vmatpush1.msra.mxu0 %v961
        %1244 = vmatprep.subr.mxu0 0.0
        %1245 = vmatpush1.msra.mxu0 %v960
        %1246 = vmatprep.subr.mxu0 0.0
        %1247 = vmatpush1.msra.mxu0 %v959
        %1248 = vmatprep.subr.mxu0 0.0
        %1249 = vmatpush1.msra.mxu0 %v958
        %1250 = vmatprep.subr.mxu0 0.0
        %1251 = vmatpush1.msra.mxu0 %v957
        %1252 = vmatprep.subr.mxu0 0.0
        %1253 = vmatpush2.msra.mxu0 %v988
        %1254 = vmatprep.subr.mxu0 0.0
        %1255 = vmatpush2.msra.mxu0 %v987
        %1256 = vmatprep.subr.mxu0 0.0
        %1257 = vmatpush2.msra.mxu0 %v986
        %1258 = vmatprep.subr.mxu0 0.0
        %1259 = vmatpush2.msra.mxu0 %v985
        %1260 = vmatprep.subr.mxu0 0.0
        %1261 = vmatpush2.msra.mxu0 %v984
        %1262 = vmatprep.subr.mxu0 0.0
        %1263 = vmatpush2.msra.mxu0 %v983
        %1264 = vmatprep.subr.mxu0 0.0
        %1265 = vmatpush2.msra.mxu0 %v982
        %1266 = vmatprep.subr.mxu0 0.0
        %1267 = vmatpush2.msra.mxu0 %v981
        %1268 = vmatprep.subr.mxu0 0.0
        %1269 = vmatpush2.msra.mxu0 %v980
        %1270 = vmatprep.subr.mxu0 0.0
        %1271 = vmatpush2.msra.mxu0 %v979
        %1272 = vmatprep.subr.mxu0 0.0
        %1273 = vmatpush2.msra.mxu0 %v978
        %1274 = vmatprep.subr.mxu0 0.0
        %1275 = vmatpush2.msra.mxu0 %v977
        %1276 = vmatprep.subr.mxu0 0.0
        %1277 = vmatpush2.msra.mxu0 %v976
        %1278 = vmatprep.subr.mxu0 0.0
        %1279 = vmatpush2.msra.mxu0 %v975
        %1280 = vmatprep.subr.mxu0 0.0
        %1281 = vmatpush2.msra.mxu0 %v974
        %1282 = vmatprep.subr.mxu0 0.0
        %1283 = vmatpush2.msra.mxu0 %v973
        %1284 = vmatprep.mubr.f32.mxu0 %v942
        %1285 = vmatmul.mubr.f32.gmra.mxu0 %v941
        %v1286 = vpop.f32.mrf.mxu0
        %v1287 = vadd.f32 %v1218, %v1286
        %v1288 = vpop.f32.mrf.mxu0
        %1289 = vdwg.mxu0
        %1290 = vmatprep.subr.mxu0 0.0
        %1291 = vmatpush1.msra.mxu0 %v1004
        %1292 = vmatprep.subr.mxu0 0.0
        %1293 = vmatpush1.msra.mxu0 %v1003
        %1294 = vmatprep.subr.mxu0 0.0
        %1295 = vmatpush1.msra.mxu0 %v1002
        %1296 = vmatprep.subr.mxu0 0.0
        %1297 = vmatpush1.msra.mxu0 %v1001
        %1298 = vmatprep.subr.mxu0 0.0
        %1299 = vmatpush1.msra.mxu0 %v1000
        %1300 = vmatprep.subr.mxu0 0.0
        %1301 = vmatpush1.msra.mxu0 %v999
        %1302 = vmatprep.subr.mxu0 0.0
        %1303 = vmatpush1.msra.mxu0 %v998
        %1304 = vmatprep.subr.mxu0 0.0
        %1305 = vmatpush1.msra.mxu0 %v997
        %1306 = vmatprep.subr.mxu0 0.0
        %1307 = vmatpush1.msra.mxu0 %v996
        %1308 = vmatprep.subr.mxu0 0.0
        %1309 = vmatpush1.msra.mxu0 %v995
        %1310 = vmatprep.subr.mxu0 0.0
        %1311 = vmatpush1.msra.mxu0 %v994
        %1312 = vmatprep.subr.mxu0 0.0
        %1313 = vmatpush1.msra.mxu0 %v993
        %1314 = vmatprep.subr.mxu0 0.0
        %1315 = vmatpush1.msra.mxu0 %v992
        %1316 = vmatprep.subr.mxu0 0.0
        %1317 = vmatpush1.msra.mxu0 %v991
        %1318 = vmatprep.subr.mxu0 0.0
        %1319 = vmatpush1.msra.mxu0 %v990
        %1320 = vmatprep.subr.mxu0 0.0
        %1321 = vmatpush1.msra.mxu0 %v989
        %1322 = vmatprep.subr.mxu0 0.0
        %1323 = vmatpush2.msra.mxu0 %v1020
        %1324 = vmatprep.subr.mxu0 0.0
        %1325 = vmatpush2.msra.mxu0 %v1019
        %1326 = vmatprep.subr.mxu0 0.0
        %1327 = vmatpush2.msra.mxu0 %v1018
        %1328 = vmatprep.subr.mxu0 0.0
        %1329 = vmatpush2.msra.mxu0 %v1017
        %1330 = vmatprep.subr.mxu0 0.0
        %1331 = vmatpush2.msra.mxu0 %v1016
        %1332 = vmatprep.subr.mxu0 0.0
        %1333 = vmatpush2.msra.mxu0 %v1015
        %1334 = vmatprep.subr.mxu0 0.0
        %1335 = vmatpush2.msra.mxu0 %v1014
        %1336 = vmatprep.subr.mxu0 0.0
        %1337 = vmatpush2.msra.mxu0 %v1013
        %1338 = vmatprep.subr.mxu0 0.0
        %1339 = vmatpush2.msra.mxu0 %v1012
        %1340 = vmatprep.subr.mxu0 0.0
        %1341 = vmatpush2.msra.mxu0 %v1011
        %1342 = vmatprep.subr.mxu0 0.0
        %1343 = vmatpush2.msra.mxu0 %v1010
        %1344 = vmatprep.subr.mxu0 0.0
        %1345 = vmatpush2.msra.mxu0 %v1009
        %1346 = vmatprep.subr.mxu0 0.0
        %1347 = vmatpush2.msra.mxu0 %v1008
        %1348 = vmatprep.subr.mxu0 0.0
        %1349 = vmatpush2.msra.mxu0 %v1007
        %1350 = vmatprep.subr.mxu0 0.0
        %1351 = vmatpush2.msra.mxu0 %v1006
        %1352 = vmatprep.subr.mxu0 0.0
        %1353 = vmatpush2.msra.mxu0 %v1005
        %1354 = vmatprep.mubr.f32.mxu0 %v944
        %1355 = vmatmul.mubr.f32.gmra.mxu0 %v943
        %v1356 = vpop.f32.mrf.mxu0
        %v1357 = vadd.f32 %v1287, %v1356
        %v1358 = vpop.f32.mrf.mxu0
        %1359 = vdwg.mxu0
        %1360 = vmatprep.subr.mxu0 0.0
        %1361 = vmatpush1.msra.mxu0 %v1036
        %1362 = vmatprep.subr.mxu0 0.0
        %1363 = vmatpush1.msra.mxu0 %v1035
        %1364 = vmatprep.subr.mxu0 0.0
        %1365 = vmatpush1.msra.mxu0 %v1034
        %1366 = vmatprep.subr.mxu0 0.0
        %1367 = vmatpush1.msra.mxu0 %v1033
        %1368 = vmatprep.subr.mxu0 0.0
        %1369 = vmatpush1.msra.mxu0 %v1032
        %1370 = vmatprep.subr.mxu0 0.0
        %1371 = vmatpush1.msra.mxu0 %v1031
        %1372 = vmatprep.subr.mxu0 0.0
        %1373 = vmatpush1.msra.mxu0 %v1030
        %1374 = vmatprep.subr.mxu0 0.0
        %1375 = vmatpush1.msra.mxu0 %v1029
        %1376 = vmatprep.subr.mxu0 0.0
        %1377 = vmatpush1.msra.mxu0 %v1028
        %1378 = vmatprep.subr.mxu0 0.0
        %1379 = vmatpush1.msra.mxu0 %v1027
        %1380 = vmatprep.subr.mxu0 0.0
        %1381 = vmatpush1.msra.mxu0 %v1026
        %1382 = vmatprep.subr.mxu0 0.0
        %1383 = vmatpush1.msra.mxu0 %v1025
        %1384 = vmatprep.subr.mxu0 0.0
        %1385 = vmatpush1.msra.mxu0 %v1024
        %1386 = vmatprep.subr.mxu0 0.0
        %1387 = vmatpush1.msra.mxu0 %v1023
        %1388 = vmatprep.subr.mxu0 0.0
        %1389 = vmatpush1.msra.mxu0 %v1022
        %1390 = vmatprep.subr.mxu0 0.0
        %1391 = vmatpush1.msra.mxu0 %v1021
        %1392 = vmatprep.subr.mxu0 0.0
        %1393 = vmatpush2.msra.mxu0 %v1052
        %1394 = vmatprep.subr.mxu0 0.0
        %1395 = vmatpush2.msra.mxu0 %v1051
        %1396 = vmatprep.subr.mxu0 0.0
        %1397 = vmatpush2.msra.mxu0 %v1050
        %1398 = vmatprep.subr.mxu0 0.0
        %1399 = vmatpush2.msra.mxu0 %v1049
        %1400 = vmatprep.subr.mxu0 0.0
        %1401 = vmatpush2.msra.mxu0 %v1048
        %1402 = vmatprep.subr.mxu0 0.0
        %1403 = vmatpush2.msra.mxu0 %v1047
        %1404 = vmatprep.subr.mxu0 0.0
        %1405 = vmatpush2.msra.mxu0 %v1046
        %1406 = vmatprep.subr.mxu0 0.0
        %1407 = vmatpush2.msra.mxu0 %v1045
        %1408 = vmatprep.subr.mxu0 0.0
        %1409 = vmatpush2.msra.mxu0 %v1044
        %1410 = vmatprep.subr.mxu0 0.0
        %1411 = vmatpush2.msra.mxu0 %v1043
        %1412 = vmatprep.subr.mxu0 0.0
        %1413 = vmatpush2.msra.mxu0 %v1042
        %1414 = vmatprep.subr.mxu0 0.0
        %1415 = vmatpush2.msra.mxu0 %v1041
        %1416 = vmatprep.subr.mxu0 0.0
        %1417 = vmatpush2.msra.mxu0 %v1040
        %1418 = vmatprep.subr.mxu0 0.0
        %1419 = vmatpush2.msra.mxu0 %v1039
        %1420 = vmatprep.subr.mxu0 0.0
        %1421 = vmatpush2.msra.mxu0 %v1038
        %1422 = vmatprep.subr.mxu0 0.0
        %1423 = vmatpush2.msra.mxu0 %v1037
        %1424 = vmatprep.mubr.f32.mxu0 %v946
        %1425 = vmatmul.mubr.f32.gmra.mxu0 %v945
        %v1426 = vpop.f32.mrf.mxu0
        %v1427 = vadd.f32 %v1357, %v1426
        %v1428 = vpop.f32.mrf.mxu0
        %1429 = vdwg.mxu0
        %1430 = vmatprep.subr.mxu0 0.0
        %1431 = vmatpush1.msra.mxu0 %v1068
        %1432 = vmatprep.subr.mxu0 0.0
        %1433 = vmatpush1.msra.mxu0 %v1067
        %1434 = vmatprep.subr.mxu0 0.0
        %1435 = vmatpush1.msra.mxu0 %v1066
        %1436 = vmatprep.subr.mxu0 0.0
        %1437 = vmatpush1.msra.mxu0 %v1065
        %1438 = vmatprep.subr.mxu0 0.0
        %1439 = vmatpush1.msra.mxu0 %v1064
        %1440 = vmatprep.subr.mxu0 0.0
        %1441 = vmatpush1.msra.mxu0 %v1063
        %1442 = vmatprep.subr.mxu0 0.0
        %1443 = vmatpush1.msra.mxu0 %v1062
        %1444 = vmatprep.subr.mxu0 0.0
        %1445 = vmatpush1.msra.mxu0 %v1061
        %1446 = vmatprep.subr.mxu0 0.0
        %1447 = vmatpush1.msra.mxu0 %v1060
        %1448 = vmatprep.subr.mxu0 0.0
        %1449 = vmatpush1.msra.mxu0 %v1059
        %1450 = vmatprep.subr.mxu0 0.0
        %1451 = vmatpush1.msra.mxu0 %v1058
        %1452 = vmatprep.subr.mxu0 0.0
        %1453 = vmatpush1.msra.mxu0 %v1057
        %1454 = vmatprep.subr.mxu0 0.0
        %1455 = vmatpush1.msra.mxu0 %v1056
        %1456 = vmatprep.subr.mxu0 0.0
        %1457 = vmatpush1.msra.mxu0 %v1055
        %1458 = vmatprep.subr.mxu0 0.0
        %1459 = vmatpush1.msra.mxu0 %v1054
        %1460 = vmatprep.subr.mxu0 0.0
        %1461 = vmatpush1.msra.mxu0 %v1053
        %1462 = vmatprep.subr.mxu0 0.0
        %1463 = vmatpush2.msra.mxu0 %v1084
        %1464 = vmatprep.subr.mxu0 0.0
        %1465 = vmatpush2.msra.mxu0 %v1083
        %1466 = vmatprep.subr.mxu0 0.0
        %1467 = vmatpush2.msra.mxu0 %v1082
        %1468 = vmatprep.subr.mxu0 0.0
        %1469 = vmatpush2.msra.mxu0 %v1081
        %1470 = vmatprep.subr.mxu0 0.0
        %1471 = vmatpush2.msra.mxu0 %v1080
        %1472 = vmatprep.subr.mxu0 0.0
        %1473 = vmatpush2.msra.mxu0 %v1079
        %1474 = vmatprep.subr.mxu0 0.0
        %1475 = vmatpush2.msra.mxu0 %v1078
        %1476 = vmatprep.subr.mxu0 0.0
        %1477 = vmatpush2.msra.mxu0 %v1077
        %1478 = vmatprep.subr.mxu0 0.0
        %1479 = vmatpush2.msra.mxu0 %v1076
        %1480 = vmatprep.subr.mxu0 0.0
        %1481 = vmatpush2.msra.mxu0 %v1075
        %1482 = vmatprep.subr.mxu0 0.0
        %1483 = vmatpush2.msra.mxu0 %v1074
        %1484 = vmatprep.subr.mxu0 0.0
        %1485 = vmatpush2.msra.mxu0 %v1073
        %1486 = vmatprep.subr.mxu0 0.0
        %1487 = vmatpush2.msra.mxu0 %v1072
        %1488 = vmatprep.subr.mxu0 0.0
        %1489 = vmatpush2.msra.mxu0 %v1071
        %1490 = vmatprep.subr.mxu0 0.0
        %1491 = vmatpush2.msra.mxu0 %v1070
        %1492 = vmatprep.subr.mxu0 0.0
        %1493 = vmatpush2.msra.mxu0 %v1069
        %1494 = vmatprep.mubr.f32.mxu0 %v948
        %1495 = vmatmul.mubr.f32.gmra.mxu0 %v947
        %v1496 = vpop.f32.mrf.mxu0
        %v1497 = vadd.f32 %v1427, %v1496
        %v1498 = vpop.f32.mrf.mxu0
        %1499 = vdwg.mxu0
        %1500 = vmatprep.subr.mxu0 0.0
        %1501 = vmatpush1.msra.mxu0 %v1100
        %1502 = vmatprep.subr.mxu0 0.0
        %1503 = vmatpush1.msra.mxu0 %v1099
        %1504 = vmatprep.subr.mxu0 0.0
        %1505 = vmatpush1.msra.mxu0 %v1098
        %1506 = vmatprep.subr.mxu0 0.0
        %1507 = vmatpush1.msra.mxu0 %v1097
        %1508 = vmatprep.subr.mxu0 0.0
        %1509 = vmatpush1.msra.mxu0 %v1096
        %1510 = vmatprep.subr.mxu0 0.0
        %1511 = vmatpush1.msra.mxu0 %v1095
        %1512 = vmatprep.subr.mxu0 0.0
        %1513 = vmatpush1.msra.mxu0 %v1094
        %1514 = vmatprep.subr.mxu0 0.0
        %1515 = vmatpush1.msra.mxu0 %v1093
        %1516 = vmatprep.subr.mxu0 0.0
        %1517 = vmatpush1.msra.mxu0 %v1092
        %1518 = vmatprep.subr.mxu0 0.0
        %1519 = vmatpush1.msra.mxu0 %v1091
        %1520 = vmatprep.subr.mxu0 0.0
        %1521 = vmatpush1.msra.mxu0 %v1090
        %1522 = vmatprep.subr.mxu0 0.0
        %1523 = vmatpush1.msra.mxu0 %v1089
        %1524 = vmatprep.subr.mxu0 0.0
        %1525 = vmatpush1.msra.mxu0 %v1088
        %1526 = vmatprep.subr.mxu0 0.0
        %1527 = vmatpush1.msra.mxu0 %v1087
        %1528 = vmatprep.subr.mxu0 0.0
        %1529 = vmatpush1.msra.mxu0 %v1086
        %1530 = vmatprep.subr.mxu0 0.0
        %1531 = vmatpush1.msra.mxu0 %v1085
        %1532 = vmatprep.subr.mxu0 0.0
        %1533 = vmatpush2.msra.mxu0 %v1116
        %1534 = vmatprep.subr.mxu0 0.0
        %1535 = vmatpush2.msra.mxu0 %v1115
        %1536 = vmatprep.subr.mxu0 0.0
        %1537 = vmatpush2.msra.mxu0 %v1114
        %1538 = vmatprep.subr.mxu0 0.0
        %1539 = vmatpush2.msra.mxu0 %v1113
        %1540 = vmatprep.subr.mxu0 0.0
        %1541 = vmatpush2.msra.mxu0 %v1112
        %1542 = vmatprep.subr.mxu0 0.0
        %1543 = vmatpush2.msra.mxu0 %v1111
        %1544 = vmatprep.subr.mxu0 0.0
        %1545 = vmatpush2.msra.mxu0 %v1110
        %1546 = vmatprep.subr.mxu0 0.0
        %1547 = vmatpush2.msra.mxu0 %v1109
        %1548 = vmatprep.subr.mxu0 0.0
        %1549 = vmatpush2.msra.mxu0 %v1108
        %1550 = vmatprep.subr.mxu0 0.0
        %1551 = vmatpush2.msra.mxu0 %v1107
        %1552 = vmatprep.subr.mxu0 0.0
        %1553 = vmatpush2.msra.mxu0 %v1106
        %1554 = vmatprep.subr.mxu0 0.0
        %1555 = vmatpush2.msra.mxu0 %v1105
        %1556 = vmatprep.subr.mxu0 0.0
        %1557 = vmatpush2.msra.mxu0 %v1104
        %1558 = vmatprep.subr.mxu0 0.0
        %1559 = vmatpush2.msra.mxu0 %v1103
        %1560 = vmatprep.subr.mxu0 0.0
        %1561 = vmatpush2.msra.mxu0 %v1102
        %1562 = vmatprep.subr.mxu0 0.0
        %1563 = vmatpush2.msra.mxu0 %v1101
        %1564 = vmatprep.mubr.f32.mxu0 %v950
        %1565 = vmatmul.mubr.f32.gmra.mxu0 %v949
        %v1566 = vpop.f32.mrf.mxu0
        %v1567 = vadd.f32 %v1497, %v1566
        %v1568 = vpop.f32.mrf.mxu0
        %1569 = vdwg.mxu0
        %1570 = vmatprep.subr.mxu0 0.0
        %1571 = vmatpush1.msra.mxu0 %v1132
        %1572 = vmatprep.subr.mxu0 0.0
        %1573 = vmatpush1.msra.mxu0 %v1131
        %1574 = vmatprep.subr.mxu0 0.0
        %1575 = vmatpush1.msra.mxu0 %v1130
        %1576 = vmatprep.subr.mxu0 0.0
        %1577 = vmatpush1.msra.mxu0 %v1129
        %1578 = vmatprep.subr.mxu0 0.0
        %1579 = vmatpush1.msra.mxu0 %v1128
        %1580 = vmatprep.subr.mxu0 0.0
        %1581 = vmatpush1.msra.mxu0 %v1127
        %1582 = vmatprep.subr.mxu0 0.0
        %1583 = vmatpush1.msra.mxu0 %v1126
        %1584 = vmatprep.subr.mxu0 0.0
        %1585 = vmatpush1.msra.mxu0 %v1125
        %1586 = vmatprep.subr.mxu0 0.0
        %1587 = vmatpush1.msra.mxu0 %v1124
        %1588 = vmatprep.subr.mxu0 0.0
        %1589 = vmatpush1.msra.mxu0 %v1123
        %1590 = vmatprep.subr.mxu0 0.0
        %1591 = vmatpush1.msra.mxu0 %v1122
        %1592 = vmatprep.subr.mxu0 0.0
        %1593 = vmatpush1.msra.mxu0 %v1121
        %1594 = vmatprep.subr.mxu0 0.0
        %1595 = vmatpush1.msra.mxu0 %v1120
        %1596 = vmatprep.subr.mxu0 0.0
        %1597 = vmatpush1.msra.mxu0 %v1119
        %1598 = vmatprep.subr.mxu0 0.0
        %1599 = vmatpush1.msra.mxu0 %v1118
        %1600 = vmatprep.subr.mxu0 0.0
        %1601 = vmatpush1.msra.mxu0 %v1117
        %1602 = vmatprep.subr.mxu0 0.0
        %1603 = vmatpush2.msra.mxu0 %v1148
        %1604 = vmatprep.subr.mxu0 0.0
        %1605 = vmatpush2.msra.mxu0 %v1147
        %1606 = vmatprep.subr.mxu0 0.0
        %1607 = vmatpush2.msra.mxu0 %v1146
        %1608 = vmatprep.subr.mxu0 0.0
        %1609 = vmatpush2.msra.mxu0 %v1145
        %1610 = vmatprep.subr.mxu0 0.0
        %1611 = vmatpush2.msra.mxu0 %v1144
        %1612 = vmatprep.subr.mxu0 0.0
        %1613 = vmatpush2.msra.mxu0 %v1143
        %1614 = vmatprep.subr.mxu0 0.0
        %1615 = vmatpush2.msra.mxu0 %v1142
        %1616 = vmatprep.subr.mxu0 0.0
        %1617 = vmatpush2.msra.mxu0 %v1141
        %1618 = vmatprep.subr.mxu0 0.0
        %1619 = vmatpush2.msra.mxu0 %v1140
        %1620 = vmatprep.subr.mxu0 0.0
        %1621 = vmatpush2.msra.mxu0 %v1139
        %1622 = vmatprep.subr.mxu0 0.0
        %1623 = vmatpush2.msra.mxu0 %v1138
        %1624 = vmatprep.subr.mxu0 0.0
        %1625 = vmatpush2.msra.mxu0 %v1137
        %1626 = vmatprep.subr.mxu0 0.0
        %1627 = vmatpush2.msra.mxu0 %v1136
        %1628 = vmatprep.subr.mxu0 0.0
        %1629 = vmatpush2.msra.mxu0 %v1135
        %1630 = vmatprep.subr.mxu0 0.0
        %1631 = vmatpush2.msra.mxu0 %v1134
        %1632 = vmatprep.subr.mxu0 0.0
        %1633 = vmatpush2.msra.mxu0 %v1133
        %1634 = vmatprep.mubr.f32.mxu0 %v952
        %1635 = vmatmul.mubr.f32.gmra.mxu0 %v951
        %v1636 = vpop.f32.mrf.mxu0
        %v1637 = vadd.f32 %v1567, %v1636
        %v1638 = vpop.f32.mrf.mxu0
        %1639 = vdwg.mxu0
        %1640 = vmatprep.subr.mxu0 0.0
        %1641 = vmatpush1.msra.mxu0 %v1164
        %1642 = vmatprep.subr.mxu0 0.0
        %1643 = vmatpush1.msra.mxu0 %v1163
        %1644 = vmatprep.subr.mxu0 0.0
        %1645 = vmatpush1.msra.mxu0 %v1162
        %1646 = vmatprep.subr.mxu0 0.0
        %1647 = vmatpush1.msra.mxu0 %v1161
        %1648 = vmatprep.subr.mxu0 0.0
        %1649 = vmatpush1.msra.mxu0 %v1160
        %1650 = vmatprep.subr.mxu0 0.0
        %1651 = vmatpush1.msra.mxu0 %v1159
        %1652 = vmatprep.subr.mxu0 0.0
        %1653 = vmatpush1.msra.mxu0 %v1158
        %1654 = vmatprep.subr.mxu0 0.0
        %1655 = vmatpush1.msra.mxu0 %v1157
        %1656 = vmatprep.subr.mxu0 0.0
        %1657 = vmatpush1.msra.mxu0 %v1156
        %1658 = vmatprep.subr.mxu0 0.0
        %1659 = vmatpush1.msra.mxu0 %v1155
        %1660 = vmatprep.subr.mxu0 0.0
        %1661 = vmatpush1.msra.mxu0 %v1154
        %1662 = vmatprep.subr.mxu0 0.0
        %1663 = vmatpush1.msra.mxu0 %v1153
        %1664 = vmatprep.subr.mxu0 0.0
        %1665 = vmatpush1.msra.mxu0 %v1152
        %1666 = vmatprep.subr.mxu0 0.0
        %1667 = vmatpush1.msra.mxu0 %v1151
        %1668 = vmatprep.subr.mxu0 0.0
        %1669 = vmatpush1.msra.mxu0 %v1150
        %1670 = vmatprep.subr.mxu0 0.0
        %1671 = vmatpush1.msra.mxu0 %v1149
        %1672 = vmatprep.subr.mxu0 0.0
        %1673 = vmatpush2.msra.mxu0 %v1180
        %1674 = vmatprep.subr.mxu0 0.0
        %1675 = vmatpush2.msra.mxu0 %v1179
        %1676 = vmatprep.subr.mxu0 0.0
        %1677 = vmatpush2.msra.mxu0 %v1178
        %1678 = vmatprep.subr.mxu0 0.0
        %1679 = vmatpush2.msra.mxu0 %v1177
        %1680 = vmatprep.subr.mxu0 0.0
        %1681 = vmatpush2.msra.mxu0 %v1176
        %1682 = vmatprep.subr.mxu0 0.0
        %1683 = vmatpush2.msra.mxu0 %v1175
        %1684 = vmatprep.subr.mxu0 0.0
        %1685 = vmatpush2.msra.mxu0 %v1174
        %1686 = vmatprep.subr.mxu0 0.0
        %1687 = vmatpush2.msra.mxu0 %v1173
        %1688 = vmatprep.subr.mxu0 0.0
        %1689 = vmatpush2.msra.mxu0 %v1172
        %1690 = vmatprep.subr.mxu0 0.0
        %1691 = vmatpush2.msra.mxu0 %v1171
        %1692 = vmatprep.subr.mxu0 0.0
        %1693 = vmatpush2.msra.mxu0 %v1170
        %1694 = vmatprep.subr.mxu0 0.0
        %1695 = vmatpush2.msra.mxu0 %v1169
        %1696 = vmatprep.subr.mxu0 0.0
        %1697 = vmatpush2.msra.mxu0 %v1168
        %1698 = vmatprep.subr.mxu0 0.0
        %1699 = vmatpush2.msra.mxu0 %v1167
        %1700 = vmatprep.subr.mxu0 0.0
        %1701 = vmatpush2.msra.mxu0 %v1166
        %1702 = vmatprep.subr.mxu0 0.0
        %1703 = vmatpush2.msra.mxu0 %v1165
        %1704 = vmatprep.mubr.f32.mxu0 %v954
        %1705 = vmatmul.mubr.f32.gmra.mxu0 %v953
        %v1706 = vpop.f32.mrf.mxu0
        %v1707 = vadd.f32 %v1637, %v1706
        %v1708 = vpop.f32.mrf.mxu0
        %1709 = vdwg.mxu0
        %1710 = vmatprep.subr.mxu0 0.0
        %1711 = vmatpush1.msra.mxu0 %v1196
        %1712 = vmatprep.subr.mxu0 0.0
        %1713 = vmatpush1.msra.mxu0 %v1195
        %1714 = vmatprep.subr.mxu0 0.0
        %1715 = vmatpush1.msra.mxu0 %v1194
        %1716 = vmatprep.subr.mxu0 0.0
        %1717 = vmatpush1.msra.mxu0 %v1193
        %1718 = vmatprep.subr.mxu0 0.0
        %1719 = vmatpush1.msra.mxu0 %v1192
        %1720 = vmatprep.subr.mxu0 0.0
        %1721 = vmatpush1.msra.mxu0 %v1191
        %1722 = vmatprep.subr.mxu0 0.0
        %1723 = vmatpush1.msra.mxu0 %v1190
        %1724 = vmatprep.subr.mxu0 0.0
        %1725 = vmatpush1.msra.mxu0 %v1189
        %1726 = vmatprep.subr.mxu0 0.0
        %1727 = vmatpush1.msra.mxu0 %v1188
        %1728 = vmatprep.subr.mxu0 0.0
        %1729 = vmatpush1.msra.mxu0 %v1187
        %1730 = vmatprep.subr.mxu0 0.0
        %1731 = vmatpush1.msra.mxu0 %v1186
        %1732 = vmatprep.subr.mxu0 0.0
        %1733 = vmatpush1.msra.mxu0 %v1185
        %1734 = vmatprep.subr.mxu0 0.0
        %1735 = vmatpush1.msra.mxu0 %v1184
        %1736 = vmatprep.subr.mxu0 0.0
        %1737 = vmatpush1.msra.mxu0 %v1183
        %1738 = vmatprep.subr.mxu0 0.0
        %1739 = vmatpush1.msra.mxu0 %v1182
        %1740 = vmatprep.subr.mxu0 0.0
        %1741 = vmatpush1.msra.mxu0 %v1181
        %1742 = vmatprep.subr.mxu0 0.0
        %1743 = vmatpush2.msra.mxu0 %v1212
        %1744 = vmatprep.subr.mxu0 0.0
        %1745 = vmatpush2.msra.mxu0 %v1211
        %1746 = vmatprep.subr.mxu0 0.0
        %1747 = vmatpush2.msra.mxu0 %v1210
        %1748 = vmatprep.subr.mxu0 0.0
        %1749 = vmatpush2.msra.mxu0 %v1209
        %1750 = vmatprep.subr.mxu0 0.0
        %1751 = vmatpush2.msra.mxu0 %v1208
        %1752 = vmatprep.subr.mxu0 0.0
        %1753 = vmatpush2.msra.mxu0 %v1207
        %1754 = vmatprep.subr.mxu0 0.0
        %1755 = vmatpush2.msra.mxu0 %v1206
        %1756 = vmatprep.subr.mxu0 0.0
        %1757 = vmatpush2.msra.mxu0 %v1205
        %1758 = vmatprep.subr.mxu0 0.0
        %1759 = vmatpush2.msra.mxu0 %v1204
        %1760 = vmatprep.subr.mxu0 0.0
        %1761 = vmatpush2.msra.mxu0 %v1203
        %1762 = vmatprep.subr.mxu0 0.0
        %1763 = vmatpush2.msra.mxu0 %v1202
        %1764 = vmatprep.subr.mxu0 0.0
        %1765 = vmatpush2.msra.mxu0 %v1201
        %1766 = vmatprep.subr.mxu0 0.0
        %1767 = vmatpush2.msra.mxu0 %v1200
        %1768 = vmatprep.subr.mxu0 0.0
        %1769 = vmatpush2.msra.mxu0 %v1199
        %1770 = vmatprep.subr.mxu0 0.0
        %1771 = vmatpush2.msra.mxu0 %v1198
        %1772 = vmatprep.subr.mxu0 0.0
        %1773 = vmatpush2.msra.mxu0 %v1197
        %1774 = vmatprep.mubr.f32.mxu0 %v956
        %1775 = vmatmul.mubr.f32.gmra.mxu0 %v955
        %v1776 = vpop.f32.mrf.mxu0
        %v1777 = vadd.f32 %v1707, %v1776
        %v1778 = vpop.f32.mrf.mxu0
        %1779 = vdwg.mxu0
        %1780 = vst.msk [vmem:[%s215] sm:$0xff] %vm369, %v1777
        %s1781 = sand.u32 %s137, 1
        %s1782 = scalar_lea.sflag [#allocation3], %s1781
        %s1783 = sand.u32 %s137, 1
        %s1784 = smul.addr %s1783, 8
        %s1785 = scalar_lea.vmem [#allocation2], %s1784
        // Predicated region
        $region41: #{tpu_custom_call.1} parent=39 // pred_check
          %p1786 = pneg %p147
        $region42: #{tpu_custom_call.1} parent=39 // pred_check_branch
          %1788 = sbr.rel (%p1786) target = $region44
        $region43: #{tpu_custom_call.1} parent=39 // pred_region
          %s1790 = ssub.s32 128, 128
          %1791 = vsyncadd %s1782, %s1790
          %s1792 = smul.addr %s19, 128
          %s1793 = scalar_lea.hbm %s5, %s1792
          %s1795 = sshll.u32 %s1785, 4
          %s1796 = int_to_ptr.vmem [resolvable:$true] %s1795
          %1798 = dma.vmem_to_hbm [thread:$0]  %s1796, 128, %s1793, %s1782
        $region44: #{tpu_custom_call.1} parent=39 // pred_fallthru
          _
      $region40: #{tpu_custom_call.1} parent=5 // pred_fallthru
        _
      %p1799 = scmp.le.s32.totalorder 2, %s14
      // Predicated region
      $region45: #{tpu_custom_call.1} parent=5 // pred_check
        %p1800 = pneg %p1799
      $region46: #{tpu_custom_call.1} parent=5 // pred_check_branch
        %1802 = sbr.rel (%p1800) target = $region48
      $region47: #{tpu_custom_call.1} parent=5 // pred_region
        %s1803 = ssub.s32 %s14, 2
        // Predicated region
        $region49: #{tpu_custom_call.1} parent=47 // pred_check
          %p1804 = pneg %p153
        $region50: #{tpu_custom_call.1} parent=47 // pred_check_branch
          %1806 = sbr.rel (%p1804) target = $region52
        $region51: #{tpu_custom_call.1} parent=47 // pred_region
          %s1807 = sand.u32 %s138, 1
          %s1808 = scalar_lea.sflag [#allocation3], %s1807
          %s1809 = sand.u32 %s138, 1
          %s1810 = smul.addr %s1809, 8
          %s1811 = scalar_lea.vmem [#allocation2], %s1810
          %1812 = dma.done %s1808, 128
        $region52: #{tpu_custom_call.1} parent=47 // pred_fallthru
          _
      $region48: #{tpu_custom_call.1} parent=5 // pred_fallthru
        _
    $region6: #{tpu_custom_call.1} parent=1 // loop_footer
      %s18 = sadd.s32 1, %s14
    $region7: #{tpu_custom_call.1} parent=1 // loop_footer_branch
      %13 = sbr.rel target = $region3
    $region8: #{tpu_custom_call.1} parent=1 // loop_exit
      _
    %1813 = vsyncpa [#allocation3], 1
    %s1814 = scalar_lea.sflag [#allocation3], 1
    %1815 = vsyncpa %s1814, 1

</llo_original>
